<compile_context>
chip_gen: v6e
topology: v6e:2x2x1
jax: 0.10.0
libtpu: 0.0.40
codegen_flags: <defaults>
</compile_context>

<pallas_src>
import jax
import jax.numpy as jnp
from jax import lax
from jax.experimental import pallas as pl
from jax.experimental.pallas import tpu as pltpu

_SUBLANE = 8
_LANE = 128


def _round_up(n, m):
    return -(-n // m) * m


def _make_rnn_fc_kernel(num_layers, T, B_pad, H):
    """Kernel closed over static sizes.

    Ref order: x2d (T*B_pad, I),
               [w_ih_t (Din,H), w_hh_t (H,H), b (1,H)] * num_layers,
               fc_w_t (H, O_pad), fc_b (1, O_pad),
               out_ref (T*B_pad, O_pad), hidden_ref (L, B_pad, H),
               seq scratch (T*B_pad, H).
    """
    n_params = 3 * num_layers + 2

    def kernel(x_ref, *args):
        p = args[:n_params]
        out_ref = args[n_params]          # (T*B_pad, O_pad)
        hidden_ref = args[n_params + 1]   # (L, B_pad, H)
        seq_ref = args[n_params + 2]      # VMEM scratch (T*B_pad, H)

        for l in range(num_layers):
            w_ih_t = p[3 * l][...]        # (Din, H)  pre-transposed
            w_hh_t = p[3 * l + 1][...]    # (H, H)    pre-transposed
            b = p[3 * l + 2][...]         # (1, H)    b_ih + b_hh pre-folded

            # Hoisted, batched input projection (single MXU matmul per layer).
            layer_in = x_ref[...] if l == 0 else seq_ref[...]
            seq_ref[...] = jnp.dot(layer_in, w_ih_t,
                                   preferred_element_type=jnp.float32) + b

            # Serial recurrence: only the h @ w_hh matmul + tanh per step.
            def step(t, h, w_hh_t=w_hh_t):
                row = pl.ds(pl.multiple_of(t * B_pad, B_pad), B_pad)
                h_new = jnp.tanh(
                    seq_ref[row, :]
                    + jnp.dot(h, w_hh_t, preferred_element_type=jnp.float32))
                seq_ref[row, :] = h_new   # overwrite ip[t] with this layer's h_t
                return h_new

            h_last = lax.fori_loop(0, T, step,
                                   jnp.zeros((B_pad, H), jnp.float32),
                                   unroll=True)
            hidden_ref[l] = h_last        # final hidden state of layer l

        # Fully-connected head on the whole (T*B_pad, H) slab, lane-dense out.
        fc_w_t = p[3 * num_layers][...]       # (H, O_pad)
        fc_b = p[3 * num_layers + 1][...]     # (1, O_pad)
        out_ref[...] = jnp.dot(seq_ref[...], fc_w_t,
                               preferred_element_type=jnp.float32) + fc_b

    return kernel


def rnn_net_forward(x, params, num_layers, H, O):
    """Pallas equivalent of Net.forward: returns (out (B*T, O), hidden (L, B, H))."""
    B, T, I = x.shape
    B_pad = _round_up(B, _SUBLANE)
    O_pad = _round_up(O, _LANE)

    # Time-major, batch padded to a sublane multiple, flattened to a 2-D slab.
    x_tm = jnp.transpose(x, (1, 0, 2)).astype(jnp.float32)        # (T, B, I)
    x_pad = jnp.zeros((T, B_pad, I), jnp.float32).at[:, :B, :].set(x_tm)
    x2d = x_pad.reshape(T * B_pad, I)

    flat = []
    for l in range(num_layers):
        w_ih, w_hh, b_ih, b_hh = params["rnn"][l]
        flat += [w_ih.T, w_hh.T, (b_ih + b_hh).reshape(1, -1)]    # fold biases
    fc_w_t = jnp.zeros((H, O_pad), jnp.float32).at[:, :O].set(params["fc_w"].T)
    fc_b_p = jnp.zeros((1, O_pad), jnp.float32).at[0, :O].set(params["fc_b"])
    flat += [fc_w_t, fc_b_p]

    kernel = _make_rnn_fc_kernel(num_layers, T, B_pad, H)
    n_in = 1 + len(flat)

    out2d, hidden_pad = pl.pallas_call(
        kernel,
        out_shape=(jax.ShapeDtypeStruct((T * B_pad, O_pad), jnp.float32),
                   jax.ShapeDtypeStruct((num_layers, B_pad, H), jnp.float32)),
        in_specs=[pl.BlockSpec(memory_space=pltpu.MemorySpace.VMEM)] * n_in,
        out_specs=(pl.BlockSpec(memory_space=pltpu.MemorySpace.VMEM),
                   pl.BlockSpec(memory_space=pltpu.MemorySpace.VMEM)),
        scratch_shapes=[pltpu.VMEM((T * B_pad, H), jnp.float32)],
    )(x2d, *flat)

    # Strip padding and restore PyTorch's batch_first (B*T, O) row order.
    out = (out2d.reshape(T, B_pad, O_pad)[:, :B, :O]
           .transpose(1, 0, 2).reshape(B * T, O))
    hidden = hidden_pad[:, :B, :]
    return out, hidden


def reference_forward(x, params, num_layers, H, O):
    """Pure-JAX reference matching torch nn.RNN(batch_first) + nn.Linear."""
    B, T, _ = x.shape
    layer_in = x
    finals = []
    for l in range(num_layers):
        w_ih, w_hh, b_ih, b_hh = params["rnn"][l]
        h = jnp.zeros((B, H), jnp.float32)
        outs = []
        for t in range(T):
            h = jnp.tanh(layer_in[:, t, :] @ w_ih.T + b_ih + h @ w_hh.T + b_hh)
            outs.append(h)
        layer_in = jnp.stack(outs, axis=1)
        finals.append(h)
    hidden = jnp.stack(finals, axis=0)
    out = layer_in.reshape(-1, H) @ params["fc_w"].T + params["fc_b"]
    return out, hidden


if __name__ == "__main__":
    # batchSize = len(data) = 3 in the original script; small synthetic sizes.
    B, T, I, H, O, L = 3, 8, 16, 32, 16, 2  # batch, seq, inputSize, rnnOutSize, outputSize, numLayers

    key = jax.random.PRNGKey(0)
    keys = jax.random.split(key, 4 * L + 3)
    scale = float(1.0 / jnp.sqrt(H))  # PyTorch default uniform bound 1/sqrt(hidden)

    ki = 0
    rnn_params = []
    for l in range(L):
        din = I if l == 0 else H
        w_ih = jax.random.uniform(keys[ki], (H, din), jnp.float32, -scale, scale); ki += 1
        w_hh = jax.random.uniform(keys[ki], (H, H), jnp.float32, -scale, scale); ki += 1
        b_ih = jax.random.uniform(keys[ki], (H,), jnp.float32, -scale, scale); ki += 1
        b_hh = jax.random.uniform(keys[ki], (H,), jnp.float32, -scale, scale); ki += 1
        rnn_params.append((w_ih, w_hh, b_ih, b_hh))
    fc_w = jax.random.uniform(keys[ki], (O, H), jnp.float32, -scale, scale); ki += 1
    fc_b = jax.random.uniform(keys[ki], (O,), jnp.float32, -scale, scale); ki += 1
    x = jax.random.normal(keys[ki], (B, T, I), jnp.float32)

    params = {"rnn": rnn_params, "fc_w": fc_w, "fc_b": fc_b}

    out, hidden = rnn_net_forward(x, params, L, H, O)
    jax.block_until_ready((out, hidden))

    out_ref, hidden_ref = reference_forward(x, params, L, H, O)
    assert out.shape == (B * T, O) and hidden.shape == (L, B, H)
    assert jnp.allclose(out, out_ref, atol=2e-3, rtol=2e-3)
    assert jnp.allclose(hidden, hidden_ref, atol=2e-3, rtol=2e-3)
    print("KERNEL_OK")
</pallas_src>

<mosaic_0001>
module attributes {stable_mosaic.version = 11 : i64} {
  func.func @kernel(%arg0: memref<64x16xf32, #tpu.memory_space<vmem>>, %arg1: memref<16x32xf32, #tpu.memory_space<vmem>>, %arg2: memref<32x32xf32, #tpu.memory_space<vmem>>, %arg3: memref<1x32xf32, #tpu.memory_space<vmem>>, %arg4: memref<32x32xf32, #tpu.memory_space<vmem>>, %arg5: memref<32x32xf32, #tpu.memory_space<vmem>>, %arg6: memref<1x32xf32, #tpu.memory_space<vmem>>, %arg7: memref<32x128xf32, #tpu.memory_space<vmem>>, %arg8: memref<1x128xf32, #tpu.memory_space<vmem>>, %arg9: memref<64x128xf32, #tpu.memory_space<vmem>>, %arg10: memref<2x8x32xf32, #tpu.memory_space<vmem>>, %arg11: memref<64x32xf32, #tpu.memory_space<vmem>>) attributes {dimension_semantics = [], scalar_prefetch = 0 : i64, scratch_operands = 1 : i64, tpu.core_type = #tpu.core_type<tc>} {
    %c0 = arith.constant 0 : index
    %c0_0 = arith.constant 0 : index
    %0 = vector.load %arg1[%c0, %c0_0] : memref<16x32xf32, #tpu.memory_space<vmem>>, vector<16x32xf32>
    %c0_1 = arith.constant 0 : index
    %c0_2 = arith.constant 0 : index
    %1 = vector.load %arg2[%c0_1, %c0_2] : memref<32x32xf32, #tpu.memory_space<vmem>>, vector<32x32xf32>
    %c0_3 = arith.constant 0 : index
    %c0_4 = arith.constant 0 : index
    %2 = vector.load %arg3[%c0_3, %c0_4] : memref<1x32xf32, #tpu.memory_space<vmem>>, vector<1x32xf32>
    %c0_5 = arith.constant 0 : index
    %c0_6 = arith.constant 0 : index
    %3 = vector.load %arg0[%c0_5, %c0_6] : memref<64x16xf32, #tpu.memory_space<vmem>>, vector<64x16xf32>
    %cst = arith.constant dense<0.000000e+00> : vector<64x32xf32>
    %4 = tpu.matmul %3, %0, %cst {dimension_numbers = #tpu.dot_dimension_numbers<[1], [0], [0], [1], [0, 0, 1, 1], [], []>} : vector<64x16xf32>, vector<16x32xf32>, vector<64x32xf32> -> vector<64x32xf32>
    %5 = vector.broadcast %2 : vector<1x32xf32> to vector<64x32xf32>
    %6 = arith.addf %4, %5 : vector<64x32xf32>
    %c0_7 = arith.constant 0 : index
    %c0_8 = arith.constant 0 : index
    %7 = vector.load %arg11[%c0_7, %c0_8] : memref<64x32xf32, #tpu.memory_space<vmem>>, vector<64x32xf32>
    tpu.vector_store %arg11[%c0_7, %c0_8], %6 {strides = array<i32>} : memref<64x32xf32, #tpu.memory_space<vmem>>, vector<64x32xf32>,
    %cst_9 = arith.constant 0.000000e+00 : f32
    %8 = vector.broadcast %cst_9 : f32 to vector<8x32xf32>
    %c0_i32 = arith.constant 0 : i32
    %c8_i32 = arith.constant 8 : i32
    %9 = arith.muli %c0_i32, %c8_i32 : i32
    %10 = tpu.assume_multiple %9, 8 : i32
    %11 = arith.index_cast %10 : i32 to index
    %c0_10 = arith.constant 0 : index
    %12 = vector.load %arg11[%11, %c0_10] : memref<64x32xf32, #tpu.memory_space<vmem>>, vector<8x32xf32>
    %cst_11 = arith.constant dense<0.000000e+00> : vector<8x32xf32>
    %13 = tpu.matmul %8, %1, %cst_11 {dimension_numbers = #tpu.dot_dimension_numbers<[1], [0], [0], [1], [0, 0, 1, 1], [], []>} : vector<8x32xf32>, vector<32x32xf32>, vector<8x32xf32> -> vector<8x32xf32>
    %14 = arith.addf %12, %13 : vector<8x32xf32>
    %15 = math.tanh %14 : vector<8x32xf32>
    %16 = arith.index_cast %10 : i32 to index
    %c0_12 = arith.constant 0 : index
    %17 = vector.load %arg11[%16, %c0_12] : memref<64x32xf32, #tpu.memory_space<vmem>>, vector<8x32xf32>
    tpu.vector_store %arg11[%16, %c0_12], %15 {strides = array<i32>} : memref<64x32xf32, #tpu.memory_space<vmem>>, vector<8x32xf32>,
    %c1_i32 = arith.constant 1 : i32
    %c8_i32_13 = arith.constant 8 : i32
    %18 = arith.muli %c1_i32, %c8_i32_13 : i32
    %19 = tpu.assume_multiple %18, 8 : i32
    %20 = arith.index_cast %19 : i32 to index
    %c0_14 = arith.constant 0 : index
    %21 = vector.load %arg11[%20, %c0_14] : memref<64x32xf32, #tpu.memory_space<vmem>>, vector<8x32xf32>
    %cst_15 = arith.constant dense<0.000000e+00> : vector<8x32xf32>
    %22 = tpu.matmul %15, %1, %cst_15 {dimension_numbers = #tpu.dot_dimension_numbers<[1], [0], [0], [1], [0, 0, 1, 1], [], []>} : vector<8x32xf32>, vector<32x32xf32>, vector<8x32xf32> -> vector<8x32xf32>
    %23 = arith.addf %21, %22 : vector<8x32xf32>
    %24 = math.tanh %23 : vector<8x32xf32>
    %25 = arith.index_cast %19 : i32 to index
    %c0_16 = arith.constant 0 : index
    %26 = vector.load %arg11[%25, %c0_16] : memref<64x32xf32, #tpu.memory_space<vmem>>, vector<8x32xf32>
    tpu.vector_store %arg11[%25, %c0_16], %24 {strides = array<i32>} : memref<64x32xf32, #tpu.memory_space<vmem>>, vector<8x32xf32>,
    %c2_i32 = arith.constant 2 : i32
    %c8_i32_17 = arith.constant 8 : i32
    %27 = arith.muli %c2_i32, %c8_i32_17 : i32
    %28 = tpu.assume_multiple %27, 8 : i32
    %29 = arith.index_cast %28 : i32 to index
    %c0_18 = arith.constant 0 : index
    %30 = vector.load %arg11[%29, %c0_18] : memref<64x32xf32, #tpu.memory_space<vmem>>, vector<8x32xf32>
    %cst_19 = arith.constant dense<0.000000e+00> : vector<8x32xf32>
    %31 = tpu.matmul %24, %1, %cst_19 {dimension_numbers = #tpu.dot_dimension_numbers<[1], [0], [0], [1], [0, 0, 1, 1], [], []>} : vector<8x32xf32>, vector<32x32xf32>, vector<8x32xf32> -> vector<8x32xf32>
    %32 = arith.addf %30, %31 : vector<8x32xf32>
    %33 = math.tanh %32 : vector<8x32xf32>
    %34 = arith.index_cast %28 : i32 to index
    %c0_20 = arith.constant 0 : index
    %35 = vector.load %arg11[%34, %c0_20] : memref<64x32xf32, #tpu.memory_space<vmem>>, vector<8x32xf32>
    tpu.vector_store %arg11[%34, %c0_20], %33 {strides = array<i32>} : memref<64x32xf32, #tpu.memory_space<vmem>>, vector<8x32xf32>,
    %c3_i32 = arith.constant 3 : i32
    %c8_i32_21 = arith.constant 8 : i32
    %36 = arith.muli %c3_i32, %c8_i32_21 : i32
    %37 = tpu.assume_multiple %36, 8 : i32
    %38 = arith.index_cast %37 : i32 to index
    %c0_22 = arith.constant 0 : index
    %39 = vector.load %arg11[%38, %c0_22] : memref<64x32xf32, #tpu.memory_space<vmem>>, vector<8x32xf32>
    %cst_23 = arith.constant dense<0.000000e+00> : vector<8x32xf32>
    %40 = tpu.matmul %33, %1, %cst_23 {dimension_numbers = #tpu.dot_dimension_numbers<[1], [0], [0], [1], [0, 0, 1, 1], [], []>} : vector<8x32xf32>, vector<32x32xf32>, vector<8x32xf32> -> vector<8x32xf32>
    %41 = arith.addf %39, %40 : vector<8x32xf32>
    %42 = math.tanh %41 : vector<8x32xf32>
    %43 = arith.index_cast %37 : i32 to index
    %c0_24 = arith.constant 0 : index
    %44 = vector.load %arg11[%43, %c0_24] : memref<64x32xf32, #tpu.memory_space<vmem>>, vector<8x32xf32>
    tpu.vector_store %arg11[%43, %c0_24], %42 {strides = array<i32>} : memref<64x32xf32, #tpu.memory_space<vmem>>, vector<8x32xf32>,
    %c4_i32 = arith.constant 4 : i32
    %c8_i32_25 = arith.constant 8 : i32
    %45 = arith.muli %c4_i32, %c8_i32_25 : i32
    %46 = tpu.assume_multiple %45, 8 : i32
    %47 = arith.index_cast %46 : i32 to index
    %c0_26 = arith.constant 0 : index
    %48 = vector.load %arg11[%47, %c0_26] : memref<64x32xf32, #tpu.memory_space<vmem>>, vector<8x32xf32>
    %cst_27 = arith.constant dense<0.000000e+00> : vector<8x32xf32>
    %49 = tpu.matmul %42, %1, %cst_27 {dimension_numbers = #tpu.dot_dimension_numbers<[1], [0], [0], [1], [0, 0, 1, 1], [], []>} : vector<8x32xf32>, vector<32x32xf32>, vector<8x32xf32> -> vector<8x32xf32>
    %50 = arith.addf %48, %49 : vector<8x32xf32>
    %51 = math.tanh %50 : vector<8x32xf32>
    %52 = arith.index_cast %46 : i32 to index
    %c0_28 = arith.constant 0 : index
    %53 = vector.load %arg11[%52, %c0_28] : memref<64x32xf32, #tpu.memory_space<vmem>>, vector<8x32xf32>
    tpu.vector_store %arg11[%52, %c0_28], %51 {strides = array<i32>} : memref<64x32xf32, #tpu.memory_space<vmem>>, vector<8x32xf32>,
    %c5_i32 = arith.constant 5 : i32
    %c8_i32_29 = arith.constant 8 : i32
    %54 = arith.muli %c5_i32, %c8_i32_29 : i32
    %55 = tpu.assume_multiple %54, 8 : i32
    %56 = arith.index_cast %55 : i32 to index
    %c0_30 = arith.constant 0 : index
    %57 = vector.load %arg11[%56, %c0_30] : memref<64x32xf32, #tpu.memory_space<vmem>>, vector<8x32xf32>
    %cst_31 = arith.constant dense<0.000000e+00> : vector<8x32xf32>
    %58 = tpu.matmul %51, %1, %cst_31 {dimension_numbers = #tpu.dot_dimension_numbers<[1], [0], [0], [1], [0, 0, 1, 1], [], []>} : vector<8x32xf32>, vector<32x32xf32>, vector<8x32xf32> -> vector<8x32xf32>
    %59 = arith.addf %57, %58 : vector<8x32xf32>
    %60 = math.tanh %59 : vector<8x32xf32>
    %61 = arith.index_cast %55 : i32 to index
    %c0_32 = arith.constant 0 : index
    %62 = vector.load %arg11[%61, %c0_32] : memref<64x32xf32, #tpu.memory_space<vmem>>, vector<8x32xf32>
    tpu.vector_store %arg11[%61, %c0_32], %60 {strides = array<i32>} : memref<64x32xf32, #tpu.memory_space<vmem>>, vector<8x32xf32>,
    %c6_i32 = arith.constant 6 : i32
    %c8_i32_33 = arith.constant 8 : i32
    %63 = arith.muli %c6_i32, %c8_i32_33 : i32
    %64 = tpu.assume_multiple %63, 8 : i32
    %65 = arith.index_cast %64 : i32 to index
    %c0_34 = arith.constant 0 : index
    %66 = vector.load %arg11[%65, %c0_34] : memref<64x32xf32, #tpu.memory_space<vmem>>, vector<8x32xf32>
    %cst_35 = arith.constant dense<0.000000e+00> : vector<8x32xf32>
    %67 = tpu.matmul %60, %1, %cst_35 {dimension_numbers = #tpu.dot_dimension_numbers<[1], [0], [0], [1], [0, 0, 1, 1], [], []>} : vector<8x32xf32>, vector<32x32xf32>, vector<8x32xf32> -> vector<8x32xf32>
    %68 = arith.addf %66, %67 : vector<8x32xf32>
    %69 = math.tanh %68 : vector<8x32xf32>
    %70 = arith.index_cast %64 : i32 to index
    %c0_36 = arith.constant 0 : index
    %71 = vector.load %arg11[%70, %c0_36] : memref<64x32xf32, #tpu.memory_space<vmem>>, vector<8x32xf32>
    tpu.vector_store %arg11[%70, %c0_36], %69 {strides = array<i32>} : memref<64x32xf32, #tpu.memory_space<vmem>>, vector<8x32xf32>,
    %c7_i32 = arith.constant 7 : i32
    %c8_i32_37 = arith.constant 8 : i32
    %72 = arith.muli %c7_i32, %c8_i32_37 : i32
    %73 = tpu.assume_multiple %72, 8 : i32
    %74 = arith.index_cast %73 : i32 to index
    %c0_38 = arith.constant 0 : index
    %75 = vector.load %arg11[%74, %c0_38] : memref<64x32xf32, #tpu.memory_space<vmem>>, vector<8x32xf32>
    %cst_39 = arith.constant dense<0.000000e+00> : vector<8x32xf32>
    %76 = tpu.matmul %69, %1, %cst_39 {dimension_numbers = #tpu.dot_dimension_numbers<[1], [0], [0], [1], [0, 0, 1, 1], [], []>} : vector<8x32xf32>, vector<32x32xf32>, vector<8x32xf32> -> vector<8x32xf32>
    %77 = arith.addf %75, %76 : vector<8x32xf32>
    %78 = math.tanh %77 : vector<8x32xf32>
    %79 = arith.index_cast %73 : i32 to index
    %c0_40 = arith.constant 0 : index
    %80 = vector.load %arg11[%79, %c0_40] : memref<64x32xf32, #tpu.memory_space<vmem>>, vector<8x32xf32>
    tpu.vector_store %arg11[%79, %c0_40], %78 {strides = array<i32>} : memref<64x32xf32, #tpu.memory_space<vmem>>, vector<8x32xf32>,
    %c8_i32_41 = arith.constant 8 : i32
    %c0_42 = arith.constant 0 : index
    %c0_43 = arith.constant 0 : index
    %c0_44 = arith.constant 0 : index
    %81 = vector.load %arg10[%c0_42, %c0_43, %c0_44] : memref<2x8x32xf32, #tpu.memory_space<vmem>>, vector<1x8x32xf32>
    %82 = vector.shape_cast %81 : vector<1x8x32xf32> to vector<8x32xf32>
    %83 = vector.shape_cast %78 : vector<8x32xf32> to vector<1x8x32xf32>
    tpu.vector_store %arg10[%c0_42, %c0_43, %c0_44], %83 {strides = array<i32>} : memref<2x8x32xf32, #tpu.memory_space<vmem>>, vector<1x8x32xf32>,
    %c0_45 = arith.constant 0 : index
    %c0_46 = arith.constant 0 : index
    %84 = vector.load %arg4[%c0_45, %c0_46] : memref<32x32xf32, #tpu.memory_space<vmem>>, vector<32x32xf32>
    %c0_47 = arith.constant 0 : index
    %c0_48 = arith.constant 0 : index
    %85 = vector.load %arg5[%c0_47, %c0_48] : memref<32x32xf32, #tpu.memory_space<vmem>>, vector<32x32xf32>
    %c0_49 = arith.constant 0 : index
    %c0_50 = arith.constant 0 : index
    %86 = vector.load %arg6[%c0_49, %c0_50] : memref<1x32xf32, #tpu.memory_space<vmem>>, vector<1x32xf32>
    %c0_51 = arith.constant 0 : index
    %c0_52 = arith.constant 0 : index
    %87 = vector.load %arg11[%c0_51, %c0_52] : memref<64x32xf32, #tpu.memory_space<vmem>>, vector<64x32xf32>
    %cst_53 = arith.constant dense<0.000000e+00> : vector<64x32xf32>
    %88 = tpu.matmul %87, %84, %cst_53 {dimension_numbers = #tpu.dot_dimension_numbers<[1], [0], [0], [1], [0, 0, 1, 1], [], []>} : vector<64x32xf32>, vector<32x32xf32>, vector<64x32xf32> -> vector<64x32xf32>
    %89 = vector.broadcast %86 : vector<1x32xf32> to vector<64x32xf32>
    %90 = arith.addf %88, %89 : vector<64x32xf32>
    %c0_54 = arith.constant 0 : index
    %c0_55 = arith.constant 0 : index
    %91 = vector.load %arg11[%c0_54, %c0_55] : memref<64x32xf32, #tpu.memory_space<vmem>>, vector<64x32xf32>
    tpu.vector_store %arg11[%c0_54, %c0_55], %90 {strides = array<i32>} : memref<64x32xf32, #tpu.memory_space<vmem>>, vector<64x32xf32>,
    %cst_56 = arith.constant 0.000000e+00 : f32
    %92 = vector.broadcast %cst_56 : f32 to vector<8x32xf32>
    %c0_i32_57 = arith.constant 0 : i32
    %c8_i32_58 = arith.constant 8 : i32
    %93 = arith.muli %c0_i32_57, %c8_i32_58 : i32
    %94 = tpu.assume_multiple %93, 8 : i32
    %95 = arith.index_cast %94 : i32 to index
    %c0_59 = arith.constant 0 : index
    %96 = vector.load %arg11[%95, %c0_59] : memref<64x32xf32, #tpu.memory_space<vmem>>, vector<8x32xf32>
    %cst_60 = arith.constant dense<0.000000e+00> : vector<8x32xf32>
    %97 = tpu.matmul %92, %85, %cst_60 {dimension_numbers = #tpu.dot_dimension_numbers<[1], [0], [0], [1], [0, 0, 1, 1], [], []>} : vector<8x32xf32>, vector<32x32xf32>, vector<8x32xf32> -> vector<8x32xf32>
    %98 = arith.addf %96, %97 : vector<8x32xf32>
    %99 = math.tanh %98 : vector<8x32xf32>
    %100 = arith.index_cast %94 : i32 to index
    %c0_61 = arith.constant 0 : index
    %101 = vector.load %arg11[%100, %c0_61] : memref<64x32xf32, #tpu.memory_space<vmem>>, vector<8x32xf32>
    tpu.vector_store %arg11[%100, %c0_61], %99 {strides = array<i32>} : memref<64x32xf32, #tpu.memory_space<vmem>>, vector<8x32xf32>,
    %c1_i32_62 = arith.constant 1 : i32
    %c8_i32_63 = arith.constant 8 : i32
    %102 = arith.muli %c1_i32_62, %c8_i32_63 : i32
    %103 = tpu.assume_multiple %102, 8 : i32
    %104 = arith.index_cast %103 : i32 to index
    %c0_64 = arith.constant 0 : index
    %105 = vector.load %arg11[%104, %c0_64] : memref<64x32xf32, #tpu.memory_space<vmem>>, vector<8x32xf32>
    %cst_65 = arith.constant dense<0.000000e+00> : vector<8x32xf32>
    %106 = tpu.matmul %99, %85, %cst_65 {dimension_numbers = #tpu.dot_dimension_numbers<[1], [0], [0], [1], [0, 0, 1, 1], [], []>} : vector<8x32xf32>, vector<32x32xf32>, vector<8x32xf32> -> vector<8x32xf32>
    %107 = arith.addf %105, %106 : vector<8x32xf32>
    %108 = math.tanh %107 : vector<8x32xf32>
    %109 = arith.index_cast %103 : i32 to index
    %c0_66 = arith.constant 0 : index
    %110 = vector.load %arg11[%109, %c0_66] : memref<64x32xf32, #tpu.memory_space<vmem>>, vector<8x32xf32>
    tpu.vector_store %arg11[%109, %c0_66], %108 {strides = array<i32>} : memref<64x32xf32, #tpu.memory_space<vmem>>, vector<8x32xf32>,
    %c2_i32_67 = arith.constant 2 : i32
    %c8_i32_68 = arith.constant 8 : i32
    %111 = arith.muli %c2_i32_67, %c8_i32_68 : i32
    %112 = tpu.assume_multiple %111, 8 : i32
    %113 = arith.index_cast %112 : i32 to index
    %c0_69 = arith.constant 0 : index
    %114 = vector.load %arg11[%113, %c0_69] : memref<64x32xf32, #tpu.memory_space<vmem>>, vector<8x32xf32>
    %cst_70 = arith.constant dense<0.000000e+00> : vector<8x32xf32>
    %115 = tpu.matmul %108, %85, %cst_70 {dimension_numbers = #tpu.dot_dimension_numbers<[1], [0], [0], [1], [0, 0, 1, 1], [], []>} : vector<8x32xf32>, vector<32x32xf32>, vector<8x32xf32> -> vector<8x32xf32>
    %116 = arith.addf %114, %115 : vector<8x32xf32>
    %117 = math.tanh %116 : vector<8x32xf32>
    %118 = arith.index_cast %112 : i32 to index
    %c0_71 = arith.constant 0 : index
    %119 = vector.load %arg11[%118, %c0_71] : memref<64x32xf32, #tpu.memory_space<vmem>>, vector<8x32xf32>
    tpu.vector_store %arg11[%118, %c0_71], %117 {strides = array<i32>} : memref<64x32xf32, #tpu.memory_space<vmem>>, vector<8x32xf32>,
    %c3_i32_72 = arith.constant 3 : i32
    %c8_i32_73 = arith.constant 8 : i32
    %120 = arith.muli %c3_i32_72, %c8_i32_73 : i32
    %121 = tpu.assume_multiple %120, 8 : i32
    %122 = arith.index_cast %121 : i32 to index
    %c0_74 = arith.constant 0 : index
    %123 = vector.load %arg11[%122, %c0_74] : memref<64x32xf32, #tpu.memory_space<vmem>>, vector<8x32xf32>
    %cst_75 = arith.constant dense<0.000000e+00> : vector<8x32xf32>
    %124 = tpu.matmul %117, %85, %cst_75 {dimension_numbers = #tpu.dot_dimension_numbers<[1], [0], [0], [1], [0, 0, 1, 1], [], []>} : vector<8x32xf32>, vector<32x32xf32>, vector<8x32xf32> -> vector<8x32xf32>
    %125 = arith.addf %123, %124 : vector<8x32xf32>
    %126 = math.tanh %125 : vector<8x32xf32>
    %127 = arith.index_cast %121 : i32 to index
    %c0_76 = arith.constant 0 : index
    %128 = vector.load %arg11[%127, %c0_76] : memref<64x32xf32, #tpu.memory_space<vmem>>, vector<8x32xf32>
    tpu.vector_store %arg11[%127, %c0_76], %126 {strides = array<i32>} : memref<64x32xf32, #tpu.memory_space<vmem>>, vector<8x32xf32>,
    %c4_i32_77 = arith.constant 4 : i32
    %c8_i32_78 = arith.constant 8 : i32
    %129 = arith.muli %c4_i32_77, %c8_i32_78 : i32
    %130 = tpu.assume_multiple %129, 8 : i32
    %131 = arith.index_cast %130 : i32 to index
    %c0_79 = arith.constant 0 : index
    %132 = vector.load %arg11[%131, %c0_79] : memref<64x32xf32, #tpu.memory_space<vmem>>, vector<8x32xf32>
    %cst_80 = arith.constant dense<0.000000e+00> : vector<8x32xf32>
    %133 = tpu.matmul %126, %85, %cst_80 {dimension_numbers = #tpu.dot_dimension_numbers<[1], [0], [0], [1], [0, 0, 1, 1], [], []>} : vector<8x32xf32>, vector<32x32xf32>, vector<8x32xf32> -> vector<8x32xf32>
    %134 = arith.addf %132, %133 : vector<8x32xf32>
    %135 = math.tanh %134 : vector<8x32xf32>
    %136 = arith.index_cast %130 : i32 to index
    %c0_81 = arith.constant 0 : index
    %137 = vector.load %arg11[%136, %c0_81] : memref<64x32xf32, #tpu.memory_space<vmem>>, vector<8x32xf32>
    tpu.vector_store %arg11[%136, %c0_81], %135 {strides = array<i32>} : memref<64x32xf32, #tpu.memory_space<vmem>>, vector<8x32xf32>,
    %c5_i32_82 = arith.constant 5 : i32
    %c8_i32_83 = arith.constant 8 : i32
    %138 = arith.muli %c5_i32_82, %c8_i32_83 : i32
    %139 = tpu.assume_multiple %138, 8 : i32
    %140 = arith.index_cast %139 : i32 to index
    %c0_84 = arith.constant 0 : index
    %141 = vector.load %arg11[%140, %c0_84] : memref<64x32xf32, #tpu.memory_space<vmem>>, vector<8x32xf32>
    %cst_85 = arith.constant dense<0.000000e+00> : vector<8x32xf32>
    %142 = tpu.matmul %135, %85, %cst_85 {dimension_numbers = #tpu.dot_dimension_numbers<[1], [0], [0], [1], [0, 0, 1, 1], [], []>} : vector<8x32xf32>, vector<32x32xf32>, vector<8x32xf32> -> vector<8x32xf32>
    %143 = arith.addf %141, %142 : vector<8x32xf32>
    %144 = math.tanh %143 : vector<8x32xf32>
    %145 = arith.index_cast %139 : i32 to index
    %c0_86 = arith.constant 0 : index
    %146 = vector.load %arg11[%145, %c0_86] : memref<64x32xf32, #tpu.memory_space<vmem>>, vector<8x32xf32>
    tpu.vector_store %arg11[%145, %c0_86], %144 {strides = array<i32>} : memref<64x32xf32, #tpu.memory_space<vmem>>, vector<8x32xf32>,
    %c6_i32_87 = arith.constant 6 : i32
    %c8_i32_88 = arith.constant 8 : i32
    %147 = arith.muli %c6_i32_87, %c8_i32_88 : i32
    %148 = tpu.assume_multiple %147, 8 : i32
    %149 = arith.index_cast %148 : i32 to index
    %c0_89 = arith.constant 0 : index
    %150 = vector.load %arg11[%149, %c0_89] : memref<64x32xf32, #tpu.memory_space<vmem>>, vector<8x32xf32>
    %cst_90 = arith.constant dense<0.000000e+00> : vector<8x32xf32>
    %151 = tpu.matmul %144, %85, %cst_90 {dimension_numbers = #tpu.dot_dimension_numbers<[1], [0], [0], [1], [0, 0, 1, 1], [], []>} : vector<8x32xf32>, vector<32x32xf32>, vector<8x32xf32> -> vector<8x32xf32>
    %152 = arith.addf %150, %151 : vector<8x32xf32>
    %153 = math.tanh %152 : vector<8x32xf32>
    %154 = arith.index_cast %148 : i32 to index
    %c0_91 = arith.constant 0 : index
    %155 = vector.load %arg11[%154, %c0_91] : memref<64x32xf32, #tpu.memory_space<vmem>>, vector<8x32xf32>
    tpu.vector_store %arg11[%154, %c0_91], %153 {strides = array<i32>} : memref<64x32xf32, #tpu.memory_space<vmem>>, vector<8x32xf32>,
    %c7_i32_92 = arith.constant 7 : i32
    %c8_i32_93 = arith.constant 8 : i32
    %156 = arith.muli %c7_i32_92, %c8_i32_93 : i32
    %157 = tpu.assume_multiple %156, 8 : i32
    %158 = arith.index_cast %157 : i32 to index
    %c0_94 = arith.constant 0 : index
    %159 = vector.load %arg11[%158, %c0_94] : memref<64x32xf32, #tpu.memory_space<vmem>>, vector<8x32xf32>
    %cst_95 = arith.constant dense<0.000000e+00> : vector<8x32xf32>
    %160 = tpu.matmul %153, %85, %cst_95 {dimension_numbers = #tpu.dot_dimension_numbers<[1], [0], [0], [1], [0, 0, 1, 1], [], []>} : vector<8x32xf32>, vector<32x32xf32>, vector<8x32xf32> -> vector<8x32xf32>
    %161 = arith.addf %159, %160 : vector<8x32xf32>
    %162 = math.tanh %161 : vector<8x32xf32>
    %163 = arith.index_cast %157 : i32 to index
    %c0_96 = arith.constant 0 : index
    %164 = vector.load %arg11[%163, %c0_96] : memref<64x32xf32, #tpu.memory_space<vmem>>, vector<8x32xf32>
    tpu.vector_store %arg11[%163, %c0_96], %162 {strides = array<i32>} : memref<64x32xf32, #tpu.memory_space<vmem>>, vector<8x32xf32>,
    %c8_i32_97 = arith.constant 8 : i32
    %c1 = arith.constant 1 : index
    %c0_98 = arith.constant 0 : index
    %c0_99 = arith.constant 0 : index
    %165 = vector.load %arg10[%c1, %c0_98, %c0_99] : memref<2x8x32xf32, #tpu.memory_space<vmem>>, vector<1x8x32xf32>
    %166 = vector.shape_cast %165 : vector<1x8x32xf32> to vector<8x32xf32>
    %167 = vector.shape_cast %162 : vector<8x32xf32> to vector<1x8x32xf32>
    tpu.vector_store %arg10[%c1, %c0_98, %c0_99], %167 {strides = array<i32>} : memref<2x8x32xf32, #tpu.memory_space<vmem>>, vector<1x8x32xf32>,
    %c0_100 = arith.constant 0 : index
    %c0_101 = arith.constant 0 : index
    %168 = vector.load %arg7[%c0_100, %c0_101] : memref<32x128xf32, #tpu.memory_space<vmem>>, vector<32x128xf32>
    %c0_102 = arith.constant 0 : index
    %c0_103 = arith.constant 0 : index
    %169 = vector.load %arg8[%c0_102, %c0_103] : memref<1x128xf32, #tpu.memory_space<vmem>>, vector<1x128xf32>
    %c0_104 = arith.constant 0 : index
    %c0_105 = arith.constant 0 : index
    %170 = vector.load %arg11[%c0_104, %c0_105] : memref<64x32xf32, #tpu.memory_space<vmem>>, vector<64x32xf32>
    %cst_106 = arith.constant dense<0.000000e+00> : vector<64x128xf32>
    %171 = tpu.matmul %170, %168, %cst_106 {dimension_numbers = #tpu.dot_dimension_numbers<[1], [0], [0], [1], [0, 0, 1, 1], [], []>} : vector<64x32xf32>, vector<32x128xf32>, vector<64x128xf32> -> vector<64x128xf32>
    %172 = vector.broadcast %169 : vector<1x128xf32> to vector<64x128xf32>
    %173 = arith.addf %171, %172 : vector<64x128xf32>
    %c0_107 = arith.constant 0 : index
    %c0_108 = arith.constant 0 : index
    %174 = vector.load %arg9[%c0_107, %c0_108] : memref<64x128xf32, #tpu.memory_space<vmem>>, vector<64x128xf32>
    tpu.vector_store %arg9[%c0_107, %c0_108], %173 {strides = array<i32>} : memref<64x128xf32, #tpu.memory_space<vmem>>, vector<64x128xf32>,
    return
  }
}

</mosaic_0001>

<llo_original>
// kernel: tpu_custom_call.1
$region0: #{tpu_custom_call.1}
  #allocation0 [shape = 'u32[]', space=smem, size = 0x4, offset = 0x4, fixed_abs, tag = 'smem constant byte address 0x4 - core index']
  #allocation1 [shape = 'u32[144,128]{1,0:T(1,128)}', space=vmem, size = 0x12000, scoped, tag = 'internal scratch']
  #allocation2 [shape = 'f32[64,32]{1,0:T(8,128)}', space=vmem, size = 0x8000, scoped, tag = 'scratch operand']
  %s0 = inlined_call_operand.vmem [shape: f32[64,16], index: 0, kind: input, shape index: {}]
  %s1 = inlined_call_operand.vmem [shape: f32[16,32], index: 1, kind: input, shape index: {}]
  %s2 = inlined_call_operand.vmem [shape: f32[32,32], index: 2, kind: input, shape index: {}]
  %s3 = inlined_call_operand.vmem [shape: f32[1,32], index: 3, kind: input, shape index: {}]
  %s4 = inlined_call_operand.vmem [shape: f32[32,32], index: 4, kind: input, shape index: {}]
  %s5 = inlined_call_operand.hbm [shape: f32[32,32], index: 5, kind: input, shape index: {}]
  %s6 = inlined_call_operand.vmem [shape: f32[1,32], index: 6, kind: input, shape index: {}]
  %s7 = inlined_call_operand.hbm [shape: f32[32,128], index: 7, kind: input, shape index: {}]
  %s8 = inlined_call_operand.vmem [shape: f32[1,128], index: 8, kind: input, shape index: {}]
  %s9 = inlined_call_operand.hbm [shape: f32[64,128], index: 9, kind: output, shape index: {0}]
  %s10 = inlined_call_operand.hbm [shape: f32[2,8,32], index: 10, kind: output, shape index: {1}]
  %11 = xla_tuple %s9, %s10
  %s12 = sld [smem:[#allocation0]]
  $region62: #{tpu_custom_call.1} parent=0
    _
  %s14 = ssub.s32 1, %s12
  %s15 = scalar_select 0, %s14, %s12
  $region1: #{tpu_custom_call.1} parent=0
    #allocation3 [shape = 'u8[16384]{0}', space=vmem, size = 0x4000, scoped, tag = 'input window, operand 5, single buffered']
    #allocation4 [shape = 's32[1]{0}', space=sflag, size = 0x4, scoped, tag = 'scoped memory for tpu_custom_call.1']
    #allocation5 [shape = 's32[1]{0}', space=sflag, size = 0x4, scoped, tag = 'scoped memory for tpu_custom_call.1']
    #allocation6 [shape = 'u8[16384]{0}', space=vmem, size = 0x4000, scoped, tag = 'input window, operand 7, single buffered']
    #allocation7 [shape = 's32[1]{0}', space=sflag, size = 0x4, scoped, tag = 'scoped memory for tpu_custom_call.1']
    #allocation8 [shape = 'u8[32768]{0}', space=vmem, size = 0x8000, scoped, tag = 'output window, operand 0, single buffered']
    #allocation9 [shape = 'u8[8192]{0}', space=vmem, size = 0x2000, scoped, tag = 'output window, operand 1, single buffered']
    #allocation10 [shape = 's32[1]{0}', space=sflag, size = 0x4, scoped, tag = 'scoped memory for tpu_custom_call.1']
    %16 = vsyncpa [#allocation4], 0
    %17 = vsyncpa [#allocation7], 0
    %18 = vsyncpa [#allocation5], 0
    %19 = vsyncpa [#allocation10], 0
    // Predicated region
    $region2: #{tpu_custom_call.1} parent=1 // pred_check
      _
    $region3: #{tpu_custom_call.1} parent=1 // pred_check_branch
      %21 = sbr.rel (0) target = $region5
    $region4: #{tpu_custom_call.1} parent=1 // pred_region
      _
    $region5: #{tpu_custom_call.1} parent=1 // pred_fallthru
      _
    // Predicated region
    $region6: #{tpu_custom_call.1} parent=1 // pred_check
      _
    $region7: #{tpu_custom_call.1} parent=1 // pred_check_branch
      %23 = sbr.rel (0) target = $region9
    $region8: #{tpu_custom_call.1} parent=1 // pred_region
      _
    $region9: #{tpu_custom_call.1} parent=1 // pred_fallthru
      _
    // Predicated region
    $region10: #{tpu_custom_call.1} parent=1 // pred_check
      _
    $region11: #{tpu_custom_call.1} parent=1 // pred_check_branch
      %25 = sbr.rel (0) target = $region13
    $region12: #{tpu_custom_call.1} parent=1 // pred_region
      _
    $region13: #{tpu_custom_call.1} parent=1 // pred_fallthru
      _
    // Predicated region
    $region14: #{tpu_custom_call.1} parent=1 // pred_check
      _
    $region15: #{tpu_custom_call.1} parent=1 // pred_check_branch
      %27 = sbr.rel (0) target = $region17
    $region16: #{tpu_custom_call.1} parent=1 // pred_region
      _
    $region17: #{tpu_custom_call.1} parent=1 // pred_fallthru
      _
    // Predicated region
    $region18: #{tpu_custom_call.1} parent=1 // pred_check
      _
    $region19: #{tpu_custom_call.1} parent=1 // pred_check_branch
      %29 = sbr.rel (0) target = $region21
    $region20: #{tpu_custom_call.1} parent=1 // pred_region
      _
    $region21: #{tpu_custom_call.1} parent=1 // pred_fallthru
      _
    // Predicated region
    $region22: #{tpu_custom_call.1} parent=1 // pred_check
      _
    $region23: #{tpu_custom_call.1} parent=1 // pred_check_branch
      %31 = sbr.rel (0) target = $region25
    $region24: #{tpu_custom_call.1} parent=1 // pred_region
      %s33 = ssub.s32 512, 512
      %34 = vsyncadd [#allocation4], %s33
      %s35 = sshll.u32 [#allocation3], 4
      %s36 = int_to_ptr.vmem [resolvable:$true] %s35
      %41 = dma.hbm_to_vmem [thread:$0]  %s5, 512, %s36, [#allocation4], 128, 128, 8
    $region25: #{tpu_custom_call.1} parent=1 // pred_fallthru
      _
    // Predicated region
    $region26: #{tpu_custom_call.1} parent=1 // pred_check
      _
    $region27: #{tpu_custom_call.1} parent=1 // pred_check_branch
      %43 = sbr.rel (0) target = $region29
    $region28: #{tpu_custom_call.1} parent=1 // pred_region
      _
    $region29: #{tpu_custom_call.1} parent=1 // pred_fallthru
      _
    // Predicated region
    $region30: #{tpu_custom_call.1} parent=1 // pred_check
      _
    $region31: #{tpu_custom_call.1} parent=1 // pred_check_branch
      %45 = sbr.rel (0) target = $region33
    $region32: #{tpu_custom_call.1} parent=1 // pred_region
      %s47 = ssub.s32 512, 512
      %48 = vsyncadd [#allocation7], %s47
      %s49 = sshll.u32 [#allocation6], 4
      %s50 = int_to_ptr.vmem [resolvable:$true] %s49
      %55 = dma.hbm_to_vmem [thread:$0]  %s7, 512, %s50, [#allocation7], 128, 128, 8
    $region33: #{tpu_custom_call.1} parent=1 // pred_fallthru
      _
    // Predicated region
    $region34: #{tpu_custom_call.1} parent=1 // pred_check
      _
    $region35: #{tpu_custom_call.1} parent=1 // pred_check_branch
      %57 = sbr.rel (0) target = $region37
    $region36: #{tpu_custom_call.1} parent=1 // pred_region
      _
    $region37: #{tpu_custom_call.1} parent=1 // pred_fallthru
      _
    // Predicated region
    $region38: #{tpu_custom_call.1} parent=1 // pred_check
      _
    $region39: #{tpu_custom_call.1} parent=1 // pred_check_branch
      %59 = sbr.rel (0) target = $region41
    $region40: #{tpu_custom_call.1} parent=1 // pred_region
      %60 = dma.done [#allocation4], 512
    $region41: #{tpu_custom_call.1} parent=1 // pred_fallthru
      _
    // Predicated region
    $region42: #{tpu_custom_call.1} parent=1 // pred_check
      _
    $region43: #{tpu_custom_call.1} parent=1 // pred_check_branch
      %62 = sbr.rel (0) target = $region45
    $region44: #{tpu_custom_call.1} parent=1 // pred_region
      %63 = dma.done [#allocation7], 512
    $region45: #{tpu_custom_call.1} parent=1 // pred_fallthru
      _
    %v64 = vld [vmem:[%s1] sm:$0xff]
    %v65 = vld [vmem:[%s1 + $0x8] sm:$0xff]
    %v66 = vld [vmem:[%s2] sm:$0xff]
    %v67 = vld [vmem:[%s2 + $0x8] sm:$0xff]
    %v68 = vld [vmem:[%s2 + $0x10] sm:$0xff]
    %v69 = vld [vmem:[%s2 + $0x18] sm:$0xff]
    %v70 = vld [vmem:[%s3] sm:$0x1]
    %v71 = vld [vmem:[%s0] sm:$0xff]
    %v72 = vld [vmem:[%s0 + $0x8] sm:$0xff]
    %v73 = vld [vmem:[%s0 + $0x10] sm:$0xff]
    %v74 = vld [vmem:[%s0 + $0x18] sm:$0xff]
    %v75 = vld [vmem:[%s0 + $0x20] sm:$0xff]
    %v76 = vld [vmem:[%s0 + $0x28] sm:$0xff]
    %v77 = vld [vmem:[%s0 + $0x30] sm:$0xff]
    %v78 = vld [vmem:[%s0 + $0x38] sm:$0xff]
    %v80 = vlaneseq
    %v81 = vshrl.u32 %v80, 7
    %v82 = vsub.s32 0, %v81
    %v83 = vrot.slane %v70, %v82
    %vm85 = vcmask 130048
    %v87 = vsel %vm85, %v71, 0
    %v90 = vsel %vm85, %v72, 0
    %v93 = vsel %vm85, %v73, 0
    %v96 = vsel %vm85, %v74, 0
    %v99 = vsel %vm85, %v75, 0
    %v102 = vsel %vm85, %v76, 0
    %v105 = vsel %vm85, %v77, 0
    %v108 = vsel %vm85, %v78, 0
    %110 = vmatprep.subr.mxu0 0.0
    %111 = vmatpush1.msra.mxu0 0.0
    %112 = vmatprep.subr.mxu0 0.0
    %113 = vmatpush1.msra.mxu0 0.0
    %114 = vmatprep.subr.mxu0 0.0
    %115 = vmatpush1.msra.mxu0 0.0
    %116 = vmatprep.subr.mxu0 0.0
    %117 = vmatpush1.msra.mxu0 0.0
    %118 = vmatprep.subr.mxu0 0.0
    %119 = vmatpush1.msra.mxu0 0.0
    %120 = vmatprep.subr.mxu0 0.0
    %121 = vmatpush1.msra.mxu0 0.0
    %122 = vmatprep.subr.mxu0 0.0
    %123 = vmatpush1.msra.mxu0 0.0
    %124 = vmatprep.subr.mxu0 0.0
    %125 = vmatpush1.msra.mxu0 0.0
    %126 = vmatprep.subr.mxu0 0.0
    %127 = vmatpush1.msra.mxu0 0.0
    %128 = vmatprep.subr.mxu0 0.0
    %129 = vmatpush1.msra.mxu0 0.0
    %130 = vmatprep.subr.mxu0 0.0
    %131 = vmatpush1.msra.mxu0 0.0
    %132 = vmatprep.subr.mxu0 0.0
    %133 = vmatpush1.msra.mxu0 0.0
    %134 = vmatprep.subr.mxu0 0.0
    %135 = vmatpush1.msra.mxu0 0.0
    %136 = vmatprep.subr.mxu0 0.0
    %137 = vmatpush1.msra.mxu0 0.0
    %138 = vmatprep.subr.mxu0 0.0
    %139 = vmatpush1.msra.mxu0 %v65
    %140 = vmatprep.subr.mxu0 0.0
    %141 = vmatpush1.msra.mxu0 %v64
    %142 = vmatprep.subr.mxu0 0.0
    %143 = vmatpush2.msra.mxu0 0.0
    %144 = vmatprep.subr.mxu0 0.0
    %145 = vmatpush2.msra.mxu0 0.0
    %146 = vmatprep.subr.mxu0 0.0
    %147 = vmatpush2.msra.mxu0 0.0
    %148 = vmatprep.subr.mxu0 0.0
    %149 = vmatpush2.msra.mxu0 0.0
    %150 = vmatprep.subr.mxu0 0.0
    %151 = vmatpush2.msra.mxu0 0.0
    %152 = vmatprep.subr.mxu0 0.0
    %153 = vmatpush2.msra.mxu0 0.0
    %154 = vmatprep.subr.mxu0 0.0
    %155 = vmatpush2.msra.mxu0 0.0
    %156 = vmatprep.subr.mxu0 0.0
    %157 = vmatpush2.msra.mxu0 0.0
    %158 = vmatprep.subr.mxu0 0.0
    %159 = vmatpush2.msra.mxu0 0.0
    %160 = vmatprep.subr.mxu0 0.0
    %161 = vmatpush2.msra.mxu0 0.0
    %162 = vmatprep.subr.mxu0 0.0
    %163 = vmatpush2.msra.mxu0 0.0
    %164 = vmatprep.subr.mxu0 0.0
    %165 = vmatpush2.msra.mxu0 0.0
    %166 = vmatprep.subr.mxu0 0.0
    %167 = vmatpush2.msra.mxu0 0.0
    %168 = vmatprep.subr.mxu0 0.0
    %169 = vmatpush2.msra.mxu0 0.0
    %170 = vmatprep.subr.mxu0 0.0
    %171 = vmatpush2.msra.mxu0 0.0
    %172 = vmatprep.subr.mxu0 0.0
    %173 = vmatpush2.msra.mxu0 0.0
    %174 = vmatprep.mubr.f32.mxu0 0.0
    %175 = vmatmul.mubr.f32.gmra.mxu0 %v87
    %v176 = vpop.f32.mrf.mxu0
    %v177 = vadd.f32 %v83, %v176
    %v178 = vpop.f32.mrf.mxu0
    %179 = vmatprep.mubr.f32.mxu0 0.0
    %180 = vmatmul.mubr.f32.gmra.mxu0 %v90
    %v181 = vpop.f32.mrf.mxu0
    %v182 = vadd.f32 %v83, %v181
    %v183 = vpop.f32.mrf.mxu0
    %184 = vmatprep.mubr.f32.mxu0 0.0
    %185 = vmatmul.mubr.f32.gmra.mxu0 %v93
    %v186 = vpop.f32.mrf.mxu0
    %v187 = vadd.f32 %v83, %v186
    %v188 = vpop.f32.mrf.mxu0
    %189 = vmatprep.mubr.f32.mxu0 0.0
    %190 = vmatmul.mubr.f32.gmra.mxu0 %v96
    %v191 = vpop.f32.mrf.mxu0
    %v192 = vadd.f32 %v83, %v191
    %v193 = vpop.f32.mrf.mxu0
    %194 = vmatprep.mubr.f32.mxu0 0.0
    %195 = vmatmul.mubr.f32.gmra.mxu0 %v99
    %v196 = vpop.f32.mrf.mxu0
    %v197 = vadd.f32 %v83, %v196
    %v198 = vpop.f32.mrf.mxu0
    %199 = vmatprep.mubr.f32.mxu0 0.0
    %200 = vmatmul.mubr.f32.gmra.mxu0 %v102
    %v201 = vpop.f32.mrf.mxu0
    %v202 = vadd.f32 %v83, %v201
    %v203 = vpop.f32.mrf.mxu0
    %204 = vmatprep.mubr.f32.mxu0 0.0
    %205 = vmatmul.mubr.f32.gmra.mxu0 %v105
    %v206 = vpop.f32.mrf.mxu0
    %v207 = vadd.f32 %v83, %v206
    %v208 = vpop.f32.mrf.mxu0
    %209 = vmatprep.mubr.f32.mxu0 0.0
    %210 = vmatmul.mubr.f32.gmra.mxu0 %v108
    %v211 = vpop.f32.mrf.mxu0
    %v212 = vadd.f32 %v83, %v211
    %v213 = vpop.f32.mrf.mxu0
    %214 = vdwg.mxu0
    %vm215 = vcmask 261120
    %216 = vst.msk [vmem:[#allocation2] sm:$0xff] %vm215, %v177
    %217 = vst.msk [vmem:[#allocation2 + $0x8] sm:$0xff] %vm215, %v182
    %218 = vst.msk [vmem:[#allocation2 + $0x10] sm:$0xff] %vm215, %v187
    %219 = vst.msk [vmem:[#allocation2 + $0x18] sm:$0xff] %vm215, %v192
    %220 = vst.msk [vmem:[#allocation2 + $0x20] sm:$0xff] %vm215, %v197
    %221 = vst.msk [vmem:[#allocation2 + $0x28] sm:$0xff] %vm215, %v202
    %222 = vst.msk [vmem:[#allocation2 + $0x30] sm:$0xff] %vm215, %v207
    %223 = vst.msk [vmem:[#allocation2 + $0x38] sm:$0xff] %vm215, %v212
    %v224 = vld [vmem:[#allocation2] sm:$0xff]
    %v226 = vsel %vm215, 0.0, 0
    %228 = vmatprep.subr.mxu0 0.0
    %229 = vmatpush1.msra.mxu0 0.0
    %230 = vmatprep.subr.mxu0 0.0
    %231 = vmatpush1.msra.mxu0 0.0
    %232 = vmatprep.subr.mxu0 0.0
    %233 = vmatpush1.msra.mxu0 0.0
    %234 = vmatprep.subr.mxu0 0.0
    %235 = vmatpush1.msra.mxu0 0.0
    %236 = vmatprep.subr.mxu0 0.0
    %237 = vmatpush1.msra.mxu0 0.0
    %238 = vmatprep.subr.mxu0 0.0
    %239 = vmatpush1.msra.mxu0 0.0
    %240 = vmatprep.subr.mxu0 0.0
    %241 = vmatpush1.msra.mxu0 0.0
    %242 = vmatprep.subr.mxu0 0.0
    %243 = vmatpush1.msra.mxu0 0.0
    %244 = vmatprep.subr.mxu0 0.0
    %245 = vmatpush1.msra.mxu0 0.0
    %246 = vmatprep.subr.mxu0 0.0
    %247 = vmatpush1.msra.mxu0 0.0
    %248 = vmatprep.subr.mxu0 0.0
    %249 = vmatpush1.msra.mxu0 0.0
    %250 = vmatprep.subr.mxu0 0.0
    %251 = vmatpush1.msra.mxu0 0.0
    %252 = vmatprep.subr.mxu0 0.0
    %253 = vmatpush1.msra.mxu0 %v69
    %254 = vmatprep.subr.mxu0 0.0
    %255 = vmatpush1.msra.mxu0 %v68
    %256 = vmatprep.subr.mxu0 0.0
    %257 = vmatpush1.msra.mxu0 %v67
    %258 = vmatprep.subr.mxu0 0.0
    %259 = vmatpush1.msra.mxu0 %v66
    %260 = vmatprep.subr.mxu0 0.0
    %261 = vmatpush2.msra.mxu0 0.0
    %262 = vmatprep.subr.mxu0 0.0
    %263 = vmatpush2.msra.mxu0 0.0
    %264 = vmatprep.subr.mxu0 0.0
    %265 = vmatpush2.msra.mxu0 0.0
    %266 = vmatprep.subr.mxu0 0.0
    %267 = vmatpush2.msra.mxu0 0.0
    %268 = vmatprep.subr.mxu0 0.0
    %269 = vmatpush2.msra.mxu0 0.0
    %270 = vmatprep.subr.mxu0 0.0
    %271 = vmatpush2.msra.mxu0 0.0
    %272 = vmatprep.subr.mxu0 0.0
    %273 = vmatpush2.msra.mxu0 0.0
    %274 = vmatprep.subr.mxu0 0.0
    %275 = vmatpush2.msra.mxu0 0.0
    %276 = vmatprep.subr.mxu0 0.0
    %277 = vmatpush2.msra.mxu0 0.0
    %278 = vmatprep.subr.mxu0 0.0
    %279 = vmatpush2.msra.mxu0 0.0
    %280 = vmatprep.subr.mxu0 0.0
    %281 = vmatpush2.msra.mxu0 0.0
    %282 = vmatprep.subr.mxu0 0.0
    %283 = vmatpush2.msra.mxu0 0.0
    %284 = vmatprep.subr.mxu0 0.0
    %285 = vmatpush2.msra.mxu0 0.0
    %286 = vmatprep.subr.mxu0 0.0
    %287 = vmatpush2.msra.mxu0 0.0
    %288 = vmatprep.subr.mxu0 0.0
    %289 = vmatpush2.msra.mxu0 0.0
    %290 = vmatprep.subr.mxu0 0.0
    %291 = vmatpush2.msra.mxu0 0.0
    %292 = vmatprep.mubr.f32.mxu0 0.0
    %293 = vmatmul.mubr.f32.gmra.mxu0 %v226
    %v294 = vpop.f32.mrf.mxu0
    %v295 = vadd.f32 0.0, %v294
    %v296 = vpop.f32.mrf.mxu0
    %297 = vdwg.mxu0
    %v298 = vadd.f32 %v224, %v295
    %v299 = vtanh.pop %v298
    %300 = vst.msk [vmem:[#allocation2] sm:$0xff] %vm215, %v299
    %s301 = scalar_lea.vmem [#allocation2], 8
    %v302 = vld [vmem:[%s301] sm:$0xff]
    %v304 = vsel %vm215, %v299, 0
    %306 = vmatprep.subr.mxu0 0.0
    %307 = vmatpush1.msra.mxu0 0.0
    %308 = vmatprep.subr.mxu0 0.0
    %309 = vmatpush1.msra.mxu0 0.0
    %310 = vmatprep.subr.mxu0 0.0
    %311 = vmatpush1.msra.mxu0 0.0
    %312 = vmatprep.subr.mxu0 0.0
    %313 = vmatpush1.msra.mxu0 0.0
    %314 = vmatprep.subr.mxu0 0.0
    %315 = vmatpush1.msra.mxu0 0.0
    %316 = vmatprep.subr.mxu0 0.0
    %317 = vmatpush1.msra.mxu0 0.0
    %318 = vmatprep.subr.mxu0 0.0
    %319 = vmatpush1.msra.mxu0 0.0
    %320 = vmatprep.subr.mxu0 0.0
    %321 = vmatpush1.msra.mxu0 0.0
    %322 = vmatprep.subr.mxu0 0.0
    %323 = vmatpush1.msra.mxu0 0.0
    %324 = vmatprep.subr.mxu0 0.0
    %325 = vmatpush1.msra.mxu0 0.0
    %326 = vmatprep.subr.mxu0 0.0
    %327 = vmatpush1.msra.mxu0 0.0
    %328 = vmatprep.subr.mxu0 0.0
    %329 = vmatpush1.msra.mxu0 0.0
    %330 = vmatprep.subr.mxu0 0.0
    %331 = vmatpush1.msra.mxu0 %v69
    %332 = vmatprep.subr.mxu0 0.0
    %333 = vmatpush1.msra.mxu0 %v68
    %334 = vmatprep.subr.mxu0 0.0
    %335 = vmatpush1.msra.mxu0 %v67
    %336 = vmatprep.subr.mxu0 0.0
    %337 = vmatpush1.msra.mxu0 %v66
    %338 = vmatprep.subr.mxu0 0.0
    %339 = vmatpush2.msra.mxu0 0.0
    %340 = vmatprep.subr.mxu0 0.0
    %341 = vmatpush2.msra.mxu0 0.0
    %342 = vmatprep.subr.mxu0 0.0
    %343 = vmatpush2.msra.mxu0 0.0
    %344 = vmatprep.subr.mxu0 0.0
    %345 = vmatpush2.msra.mxu0 0.0
    %346 = vmatprep.subr.mxu0 0.0
    %347 = vmatpush2.msra.mxu0 0.0
    %348 = vmatprep.subr.mxu0 0.0
    %349 = vmatpush2.msra.mxu0 0.0
    %350 = vmatprep.subr.mxu0 0.0
    %351 = vmatpush2.msra.mxu0 0.0
    %352 = vmatprep.subr.mxu0 0.0
    %353 = vmatpush2.msra.mxu0 0.0
    %354 = vmatprep.subr.mxu0 0.0
    %355 = vmatpush2.msra.mxu0 0.0
    %356 = vmatprep.subr.mxu0 0.0
    %357 = vmatpush2.msra.mxu0 0.0
    %358 = vmatprep.subr.mxu0 0.0
    %359 = vmatpush2.msra.mxu0 0.0
    %360 = vmatprep.subr.mxu0 0.0
    %361 = vmatpush2.msra.mxu0 0.0
    %362 = vmatprep.subr.mxu0 0.0
    %363 = vmatpush2.msra.mxu0 0.0
    %364 = vmatprep.subr.mxu0 0.0
    %365 = vmatpush2.msra.mxu0 0.0
    %366 = vmatprep.subr.mxu0 0.0
    %367 = vmatpush2.msra.mxu0 0.0
    %368 = vmatprep.subr.mxu0 0.0
    %369 = vmatpush2.msra.mxu0 0.0
    %370 = vmatprep.mubr.f32.mxu0 0.0
    %371 = vmatmul.mubr.f32.gmra.mxu0 %v304
    %v372 = vpop.f32.mrf.mxu0
    %v373 = vadd.f32 0.0, %v372
    %v374 = vpop.f32.mrf.mxu0
    %375 = vdwg.mxu0
    %v376 = vadd.f32 %v302, %v373
    %v377 = vtanh.pop %v376
    %378 = vst.msk [vmem:[%s301] sm:$0xff] %vm215, %v377
    %s379 = scalar_lea.vmem [#allocation2], 16
    %v380 = vld [vmem:[%s379] sm:$0xff]
    %v382 = vsel %vm215, %v377, 0
    %384 = vmatprep.subr.mxu0 0.0
    %385 = vmatpush1.msra.mxu0 0.0
    %386 = vmatprep.subr.mxu0 0.0
    %387 = vmatpush1.msra.mxu0 0.0
    %388 = vmatprep.subr.mxu0 0.0
    %389 = vmatpush1.msra.mxu0 0.0
    %390 = vmatprep.subr.mxu0 0.0
    %391 = vmatpush1.msra.mxu0 0.0
    %392 = vmatprep.subr.mxu0 0.0
    %393 = vmatpush1.msra.mxu0 0.0
    %394 = vmatprep.subr.mxu0 0.0
    %395 = vmatpush1.msra.mxu0 0.0
    %396 = vmatprep.subr.mxu0 0.0
    %397 = vmatpush1.msra.mxu0 0.0
    %398 = vmatprep.subr.mxu0 0.0
    %399 = vmatpush1.msra.mxu0 0.0
    %400 = vmatprep.subr.mxu0 0.0
    %401 = vmatpush1.msra.mxu0 0.0
    %402 = vmatprep.subr.mxu0 0.0
    %403 = vmatpush1.msra.mxu0 0.0
    %404 = vmatprep.subr.mxu0 0.0
    %405 = vmatpush1.msra.mxu0 0.0
    %406 = vmatprep.subr.mxu0 0.0
    %407 = vmatpush1.msra.mxu0 0.0
    %408 = vmatprep.subr.mxu0 0.0
    %409 = vmatpush1.msra.mxu0 %v69
    %410 = vmatprep.subr.mxu0 0.0
    %411 = vmatpush1.msra.mxu0 %v68
    %412 = vmatprep.subr.mxu0 0.0
    %413 = vmatpush1.msra.mxu0 %v67
    %414 = vmatprep.subr.mxu0 0.0
    %415 = vmatpush1.msra.mxu0 %v66
    %416 = vmatprep.subr.mxu0 0.0
    %417 = vmatpush2.msra.mxu0 0.0
    %418 = vmatprep.subr.mxu0 0.0
    %419 = vmatpush2.msra.mxu0 0.0
    %420 = vmatprep.subr.mxu0 0.0
    %421 = vmatpush2.msra.mxu0 0.0
    %422 = vmatprep.subr.mxu0 0.0
    %423 = vmatpush2.msra.mxu0 0.0
    %424 = vmatprep.subr.mxu0 0.0
    %425 = vmatpush2.msra.mxu0 0.0
    %426 = vmatprep.subr.mxu0 0.0
    %427 = vmatpush2.msra.mxu0 0.0
    %428 = vmatprep.subr.mxu0 0.0
    %429 = vmatpush2.msra.mxu0 0.0
    %430 = vmatprep.subr.mxu0 0.0
    %431 = vmatpush2.msra.mxu0 0.0
    %432 = vmatprep.subr.mxu0 0.0
    %433 = vmatpush2.msra.mxu0 0.0
    %434 = vmatprep.subr.mxu0 0.0
    %435 = vmatpush2.msra.mxu0 0.0
    %436 = vmatprep.subr.mxu0 0.0
    %437 = vmatpush2.msra.mxu0 0.0
    %438 = vmatprep.subr.mxu0 0.0
    %439 = vmatpush2.msra.mxu0 0.0
    %440 = vmatprep.subr.mxu0 0.0
    %441 = vmatpush2.msra.mxu0 0.0
    %442 = vmatprep.subr.mxu0 0.0
    %443 = vmatpush2.msra.mxu0 0.0
    %444 = vmatprep.subr.mxu0 0.0
    %445 = vmatpush2.msra.mxu0 0.0
    %446 = vmatprep.subr.mxu0 0.0
    %447 = vmatpush2.msra.mxu0 0.0
    %448 = vmatprep.mubr.f32.mxu0 0.0
    %449 = vmatmul.mubr.f32.gmra.mxu0 %v382
    %v450 = vpop.f32.mrf.mxu0
    %v451 = vadd.f32 0.0, %v450
    %v452 = vpop.f32.mrf.mxu0
    %453 = vdwg.mxu0
    %v454 = vadd.f32 %v380, %v451
    %v455 = vtanh.pop %v454
    %456 = vst.msk [vmem:[%s379] sm:$0xff] %vm215, %v455
    %s457 = scalar_lea.vmem [#allocation2], 24
    %v458 = vld [vmem:[%s457] sm:$0xff]
    %v460 = vsel %vm215, %v455, 0
    %462 = vmatprep.subr.mxu0 0.0
    %463 = vmatpush1.msra.mxu0 0.0
    %464 = vmatprep.subr.mxu0 0.0
    %465 = vmatpush1.msra.mxu0 0.0
    %466 = vmatprep.subr.mxu0 0.0
    %467 = vmatpush1.msra.mxu0 0.0
    %468 = vmatprep.subr.mxu0 0.0
    %469 = vmatpush1.msra.mxu0 0.0
    %470 = vmatprep.subr.mxu0 0.0
    %471 = vmatpush1.msra.mxu0 0.0
    %472 = vmatprep.subr.mxu0 0.0
    %473 = vmatpush1.msra.mxu0 0.0
    %474 = vmatprep.subr.mxu0 0.0
    %475 = vmatpush1.msra.mxu0 0.0
    %476 = vmatprep.subr.mxu0 0.0
    %477 = vmatpush1.msra.mxu0 0.0
    %478 = vmatprep.subr.mxu0 0.0
    %479 = vmatpush1.msra.mxu0 0.0
    %480 = vmatprep.subr.mxu0 0.0
    %481 = vmatpush1.msra.mxu0 0.0
    %482 = vmatprep.subr.mxu0 0.0
    %483 = vmatpush1.msra.mxu0 0.0
    %484 = vmatprep.subr.mxu0 0.0
    %485 = vmatpush1.msra.mxu0 0.0
    %486 = vmatprep.subr.mxu0 0.0
    %487 = vmatpush1.msra.mxu0 %v69
    %488 = vmatprep.subr.mxu0 0.0
    %489 = vmatpush1.msra.mxu0 %v68
    %490 = vmatprep.subr.mxu0 0.0
    %491 = vmatpush1.msra.mxu0 %v67
    %492 = vmatprep.subr.mxu0 0.0
    %493 = vmatpush1.msra.mxu0 %v66
    %494 = vmatprep.subr.mxu0 0.0
    %495 = vmatpush2.msra.mxu0 0.0
    %496 = vmatprep.subr.mxu0 0.0
    %497 = vmatpush2.msra.mxu0 0.0
    %498 = vmatprep.subr.mxu0 0.0
    %499 = vmatpush2.msra.mxu0 0.0
    %500 = vmatprep.subr.mxu0 0.0
    %501 = vmatpush2.msra.mxu0 0.0
    %502 = vmatprep.subr.mxu0 0.0
    %503 = vmatpush2.msra.mxu0 0.0
    %504 = vmatprep.subr.mxu0 0.0
    %505 = vmatpush2.msra.mxu0 0.0
    %506 = vmatprep.subr.mxu0 0.0
    %507 = vmatpush2.msra.mxu0 0.0
    %508 = vmatprep.subr.mxu0 0.0
    %509 = vmatpush2.msra.mxu0 0.0
    %510 = vmatprep.subr.mxu0 0.0
    %511 = vmatpush2.msra.mxu0 0.0
    %512 = vmatprep.subr.mxu0 0.0
    %513 = vmatpush2.msra.mxu0 0.0
    %514 = vmatprep.subr.mxu0 0.0
    %515 = vmatpush2.msra.mxu0 0.0
    %516 = vmatprep.subr.mxu0 0.0
    %517 = vmatpush2.msra.mxu0 0.0
    %518 = vmatprep.subr.mxu0 0.0
    %519 = vmatpush2.msra.mxu0 0.0
    %520 = vmatprep.subr.mxu0 0.0
    %521 = vmatpush2.msra.mxu0 0.0
    %522 = vmatprep.subr.mxu0 0.0
    %523 = vmatpush2.msra.mxu0 0.0
    %524 = vmatprep.subr.mxu0 0.0
    %525 = vmatpush2.msra.mxu0 0.0
    %526 = vmatprep.mubr.f32.mxu0 0.0
    %527 = vmatmul.mubr.f32.gmra.mxu0 %v460
    %v528 = vpop.f32.mrf.mxu0
    %v529 = vadd.f32 0.0, %v528
    %v530 = vpop.f32.mrf.mxu0
    %531 = vdwg.mxu0
    %v532 = vadd.f32 %v458, %v529
    %v533 = vtanh.pop %v532
    %534 = vst.msk [vmem:[%s457] sm:$0xff] %vm215, %v533
    %s535 = scalar_lea.vmem [#allocation2], 32
    %v536 = vld [vmem:[%s535] sm:$0xff]
    %v538 = vsel %vm215, %v533, 0
    %540 = vmatprep.subr.mxu0 0.0
    %541 = vmatpush1.msra.mxu0 0.0
    %542 = vmatprep.subr.mxu0 0.0
    %543 = vmatpush1.msra.mxu0 0.0
    %544 = vmatprep.subr.mxu0 0.0
    %545 = vmatpush1.msra.mxu0 0.0
    %546 = vmatprep.subr.mxu0 0.0
    %547 = vmatpush1.msra.mxu0 0.0
    %548 = vmatprep.subr.mxu0 0.0
    %549 = vmatpush1.msra.mxu0 0.0
    %550 = vmatprep.subr.mxu0 0.0
    %551 = vmatpush1.msra.mxu0 0.0
    %552 = vmatprep.subr.mxu0 0.0
    %553 = vmatpush1.msra.mxu0 0.0
    %554 = vmatprep.subr.mxu0 0.0
    %555 = vmatpush1.msra.mxu0 0.0
    %556 = vmatprep.subr.mxu0 0.0
    %557 = vmatpush1.msra.mxu0 0.0
    %558 = vmatprep.subr.mxu0 0.0
    %559 = vmatpush1.msra.mxu0 0.0
    %560 = vmatprep.subr.mxu0 0.0
    %561 = vmatpush1.msra.mxu0 0.0
    %562 = vmatprep.subr.mxu0 0.0
    %563 = vmatpush1.msra.mxu0 0.0
    %564 = vmatprep.subr.mxu0 0.0
    %565 = vmatpush1.msra.mxu0 %v69
    %566 = vmatprep.subr.mxu0 0.0
    %567 = vmatpush1.msra.mxu0 %v68
    %568 = vmatprep.subr.mxu0 0.0
    %569 = vmatpush1.msra.mxu0 %v67
    %570 = vmatprep.subr.mxu0 0.0
    %571 = vmatpush1.msra.mxu0 %v66
    %572 = vmatprep.subr.mxu0 0.0
    %573 = vmatpush2.msra.mxu0 0.0
    %574 = vmatprep.subr.mxu0 0.0
    %575 = vmatpush2.msra.mxu0 0.0
    %576 = vmatprep.subr.mxu0 0.0
    %577 = vmatpush2.msra.mxu0 0.0
    %578 = vmatprep.subr.mxu0 0.0
    %579 = vmatpush2.msra.mxu0 0.0
    %580 = vmatprep.subr.mxu0 0.0
    %581 = vmatpush2.msra.mxu0 0.0
    %582 = vmatprep.subr.mxu0 0.0
    %583 = vmatpush2.msra.mxu0 0.0
    %584 = vmatprep.subr.mxu0 0.0
    %585 = vmatpush2.msra.mxu0 0.0
    %586 = vmatprep.subr.mxu0 0.0
    %587 = vmatpush2.msra.mxu0 0.0
    %588 = vmatprep.subr.mxu0 0.0
    %589 = vmatpush2.msra.mxu0 0.0
    %590 = vmatprep.subr.mxu0 0.0
    %591 = vmatpush2.msra.mxu0 0.0
    %592 = vmatprep.subr.mxu0 0.0
    %593 = vmatpush2.msra.mxu0 0.0
    %594 = vmatprep.subr.mxu0 0.0
    %595 = vmatpush2.msra.mxu0 0.0
    %596 = vmatprep.subr.mxu0 0.0
    %597 = vmatpush2.msra.mxu0 0.0
    %598 = vmatprep.subr.mxu0 0.0
    %599 = vmatpush2.msra.mxu0 0.0
    %600 = vmatprep.subr.mxu0 0.0
    %601 = vmatpush2.msra.mxu0 0.0
    %602 = vmatprep.subr.mxu0 0.0
    %603 = vmatpush2.msra.mxu0 0.0
    %604 = vmatprep.mubr.f32.mxu0 0.0
    %605 = vmatmul.mubr.f32.gmra.mxu0 %v538
    %v606 = vpop.f32.mrf.mxu0
    %v607 = vadd.f32 0.0, %v606
    %v608 = vpop.f32.mrf.mxu0
    %609 = vdwg.mxu0
    %v610 = vadd.f32 %v536, %v607
    %v611 = vtanh.pop %v610
    %612 = vst.msk [vmem:[%s535] sm:$0xff] %vm215, %v611
    %s613 = scalar_lea.vmem [#allocation2], 40
    %v614 = vld [vmem:[%s613] sm:$0xff]
    %v616 = vsel %vm215, %v611, 0
    %618 = vmatprep.subr.mxu0 0.0
    %619 = vmatpush1.msra.mxu0 0.0
    %620 = vmatprep.subr.mxu0 0.0
    %621 = vmatpush1.msra.mxu0 0.0
    %622 = vmatprep.subr.mxu0 0.0
    %623 = vmatpush1.msra.mxu0 0.0
    %624 = vmatprep.subr.mxu0 0.0
    %625 = vmatpush1.msra.mxu0 0.0
    %626 = vmatprep.subr.mxu0 0.0
    %627 = vmatpush1.msra.mxu0 0.0
    %628 = vmatprep.subr.mxu0 0.0
    %629 = vmatpush1.msra.mxu0 0.0
    %630 = vmatprep.subr.mxu0 0.0
    %631 = vmatpush1.msra.mxu0 0.0
    %632 = vmatprep.subr.mxu0 0.0
    %633 = vmatpush1.msra.mxu0 0.0
    %634 = vmatprep.subr.mxu0 0.0
    %635 = vmatpush1.msra.mxu0 0.0
    %636 = vmatprep.subr.mxu0 0.0
    %637 = vmatpush1.msra.mxu0 0.0
    %638 = vmatprep.subr.mxu0 0.0
    %639 = vmatpush1.msra.mxu0 0.0
    %640 = vmatprep.subr.mxu0 0.0
    %641 = vmatpush1.msra.mxu0 0.0
    %642 = vmatprep.subr.mxu0 0.0
    %643 = vmatpush1.msra.mxu0 %v69
    %644 = vmatprep.subr.mxu0 0.0
    %645 = vmatpush1.msra.mxu0 %v68
    %646 = vmatprep.subr.mxu0 0.0
    %647 = vmatpush1.msra.mxu0 %v67
    %648 = vmatprep.subr.mxu0 0.0
    %649 = vmatpush1.msra.mxu0 %v66
    %650 = vmatprep.subr.mxu0 0.0
    %651 = vmatpush2.msra.mxu0 0.0
    %652 = vmatprep.subr.mxu0 0.0
    %653 = vmatpush2.msra.mxu0 0.0
    %654 = vmatprep.subr.mxu0 0.0
    %655 = vmatpush2.msra.mxu0 0.0
    %656 = vmatprep.subr.mxu0 0.0
    %657 = vmatpush2.msra.mxu0 0.0
    %658 = vmatprep.subr.mxu0 0.0
    %659 = vmatpush2.msra.mxu0 0.0
    %660 = vmatprep.subr.mxu0 0.0
    %661 = vmatpush2.msra.mxu0 0.0
    %662 = vmatprep.subr.mxu0 0.0
    %663 = vmatpush2.msra.mxu0 0.0
    %664 = vmatprep.subr.mxu0 0.0
    %665 = vmatpush2.msra.mxu0 0.0
    %666 = vmatprep.subr.mxu0 0.0
    %667 = vmatpush2.msra.mxu0 0.0
    %668 = vmatprep.subr.mxu0 0.0
    %669 = vmatpush2.msra.mxu0 0.0
    %670 = vmatprep.subr.mxu0 0.0
    %671 = vmatpush2.msra.mxu0 0.0
    %672 = vmatprep.subr.mxu0 0.0
    %673 = vmatpush2.msra.mxu0 0.0
    %674 = vmatprep.subr.mxu0 0.0
    %675 = vmatpush2.msra.mxu0 0.0
    %676 = vmatprep.subr.mxu0 0.0
    %677 = vmatpush2.msra.mxu0 0.0
    %678 = vmatprep.subr.mxu0 0.0
    %679 = vmatpush2.msra.mxu0 0.0
    %680 = vmatprep.subr.mxu0 0.0
    %681 = vmatpush2.msra.mxu0 0.0
    %682 = vmatprep.mubr.f32.mxu0 0.0
    %683 = vmatmul.mubr.f32.gmra.mxu0 %v616
    %v684 = vpop.f32.mrf.mxu0
    %v685 = vadd.f32 0.0, %v684
    %v686 = vpop.f32.mrf.mxu0
    %687 = vdwg.mxu0
    %v688 = vadd.f32 %v614, %v685
    %v689 = vtanh.pop %v688
    %690 = vst.msk [vmem:[%s613] sm:$0xff] %vm215, %v689
    %s691 = scalar_lea.vmem [#allocation2], 48
    %v692 = vld [vmem:[%s691] sm:$0xff]
    %v694 = vsel %vm215, %v689, 0
    %696 = vmatprep.subr.mxu0 0.0
    %697 = vmatpush1.msra.mxu0 0.0
    %698 = vmatprep.subr.mxu0 0.0
    %699 = vmatpush1.msra.mxu0 0.0
    %700 = vmatprep.subr.mxu0 0.0
    %701 = vmatpush1.msra.mxu0 0.0
    %702 = vmatprep.subr.mxu0 0.0
    %703 = vmatpush1.msra.mxu0 0.0
    %704 = vmatprep.subr.mxu0 0.0
    %705 = vmatpush1.msra.mxu0 0.0
    %706 = vmatprep.subr.mxu0 0.0
    %707 = vmatpush1.msra.mxu0 0.0
    %708 = vmatprep.subr.mxu0 0.0
    %709 = vmatpush1.msra.mxu0 0.0
    %710 = vmatprep.subr.mxu0 0.0
    %711 = vmatpush1.msra.mxu0 0.0
    %712 = vmatprep.subr.mxu0 0.0
    %713 = vmatpush1.msra.mxu0 0.0
    %714 = vmatprep.subr.mxu0 0.0
    %715 = vmatpush1.msra.mxu0 0.0
    %716 = vmatprep.subr.mxu0 0.0
    %717 = vmatpush1.msra.mxu0 0.0
    %718 = vmatprep.subr.mxu0 0.0
    %719 = vmatpush1.msra.mxu0 0.0
    %720 = vmatprep.subr.mxu0 0.0
    %721 = vmatpush1.msra.mxu0 %v69
    %722 = vmatprep.subr.mxu0 0.0
    %723 = vmatpush1.msra.mxu0 %v68
    %724 = vmatprep.subr.mxu0 0.0
    %725 = vmatpush1.msra.mxu0 %v67
    %726 = vmatprep.subr.mxu0 0.0
    %727 = vmatpush1.msra.mxu0 %v66
    %728 = vmatprep.subr.mxu0 0.0
    %729 = vmatpush2.msra.mxu0 0.0
    %730 = vmatprep.subr.mxu0 0.0
    %731 = vmatpush2.msra.mxu0 0.0
    %732 = vmatprep.subr.mxu0 0.0
    %733 = vmatpush2.msra.mxu0 0.0
    %734 = vmatprep.subr.mxu0 0.0
    %735 = vmatpush2.msra.mxu0 0.0
    %736 = vmatprep.subr.mxu0 0.0
    %737 = vmatpush2.msra.mxu0 0.0
    %738 = vmatprep.subr.mxu0 0.0
    %739 = vmatpush2.msra.mxu0 0.0
    %740 = vmatprep.subr.mxu0 0.0
    %741 = vmatpush2.msra.mxu0 0.0
    %742 = vmatprep.subr.mxu0 0.0
    %743 = vmatpush2.msra.mxu0 0.0
    %744 = vmatprep.subr.mxu0 0.0
    %745 = vmatpush2.msra.mxu0 0.0
    %746 = vmatprep.subr.mxu0 0.0
    %747 = vmatpush2.msra.mxu0 0.0
    %748 = vmatprep.subr.mxu0 0.0
    %749 = vmatpush2.msra.mxu0 0.0
    %750 = vmatprep.subr.mxu0 0.0
    %751 = vmatpush2.msra.mxu0 0.0
    %752 = vmatprep.subr.mxu0 0.0
    %753 = vmatpush2.msra.mxu0 0.0
    %754 = vmatprep.subr.mxu0 0.0
    %755 = vmatpush2.msra.mxu0 0.0
    %756 = vmatprep.subr.mxu0 0.0
    %757 = vmatpush2.msra.mxu0 0.0
    %758 = vmatprep.subr.mxu0 0.0
    %759 = vmatpush2.msra.mxu0 0.0
    %760 = vmatprep.mubr.f32.mxu0 0.0
    %761 = vmatmul.mubr.f32.gmra.mxu0 %v694
    %v762 = vpop.f32.mrf.mxu0
    %v763 = vadd.f32 0.0, %v762
    %v764 = vpop.f32.mrf.mxu0
    %765 = vdwg.mxu0
    %v766 = vadd.f32 %v692, %v763
    %v767 = vtanh.pop %v766
    %768 = vst.msk [vmem:[%s691] sm:$0xff] %vm215, %v767
    %s769 = scalar_lea.vmem [#allocation2], 56
    %v770 = vld [vmem:[%s769] sm:$0xff]
    %v772 = vsel %vm215, %v767, 0
    %774 = vmatprep.subr.mxu0 0.0
    %775 = vmatpush1.msra.mxu0 0.0
    %776 = vmatprep.subr.mxu0 0.0
    %777 = vmatpush1.msra.mxu0 0.0
    %778 = vmatprep.subr.mxu0 0.0
    %779 = vmatpush1.msra.mxu0 0.0
    %780 = vmatprep.subr.mxu0 0.0
    %781 = vmatpush1.msra.mxu0 0.0
    %782 = vmatprep.subr.mxu0 0.0
    %783 = vmatpush1.msra.mxu0 0.0
    %784 = vmatprep.subr.mxu0 0.0
    %785 = vmatpush1.msra.mxu0 0.0
    %786 = vmatprep.subr.mxu0 0.0
    %787 = vmatpush1.msra.mxu0 0.0
    %788 = vmatprep.subr.mxu0 0.0
    %789 = vmatpush1.msra.mxu0 0.0
    %790 = vmatprep.subr.mxu0 0.0
    %791 = vmatpush1.msra.mxu0 0.0
    %792 = vmatprep.subr.mxu0 0.0
    %793 = vmatpush1.msra.mxu0 0.0
    %794 = vmatprep.subr.mxu0 0.0
    %795 = vmatpush1.msra.mxu0 0.0
    %796 = vmatprep.subr.mxu0 0.0
    %797 = vmatpush1.msra.mxu0 0.0
    %798 = vmatprep.subr.mxu0 0.0
    %799 = vmatpush1.msra.mxu0 %v69
    %800 = vmatprep.subr.mxu0 0.0
    %801 = vmatpush1.msra.mxu0 %v68
    %802 = vmatprep.subr.mxu0 0.0
    %803 = vmatpush1.msra.mxu0 %v67
    %804 = vmatprep.subr.mxu0 0.0
    %805 = vmatpush1.msra.mxu0 %v66
    %806 = vmatprep.subr.mxu0 0.0
    %807 = vmatpush2.msra.mxu0 0.0
    %808 = vmatprep.subr.mxu0 0.0
    %809 = vmatpush2.msra.mxu0 0.0
    %810 = vmatprep.subr.mxu0 0.0
    %811 = vmatpush2.msra.mxu0 0.0
    %812 = vmatprep.subr.mxu0 0.0
    %813 = vmatpush2.msra.mxu0 0.0
    %814 = vmatprep.subr.mxu0 0.0
    %815 = vmatpush2.msra.mxu0 0.0
    %816 = vmatprep.subr.mxu0 0.0
    %817 = vmatpush2.msra.mxu0 0.0
    %818 = vmatprep.subr.mxu0 0.0
    %819 = vmatpush2.msra.mxu0 0.0
    %820 = vmatprep.subr.mxu0 0.0
    %821 = vmatpush2.msra.mxu0 0.0
    %822 = vmatprep.subr.mxu0 0.0
    %823 = vmatpush2.msra.mxu0 0.0
    %824 = vmatprep.subr.mxu0 0.0
    %825 = vmatpush2.msra.mxu0 0.0
    %826 = vmatprep.subr.mxu0 0.0
    %827 = vmatpush2.msra.mxu0 0.0
    %828 = vmatprep.subr.mxu0 0.0
    %829 = vmatpush2.msra.mxu0 0.0
    %830 = vmatprep.subr.mxu0 0.0
    %831 = vmatpush2.msra.mxu0 0.0
    %832 = vmatprep.subr.mxu0 0.0
    %833 = vmatpush2.msra.mxu0 0.0
    %834 = vmatprep.subr.mxu0 0.0
    %835 = vmatpush2.msra.mxu0 0.0
    %836 = vmatprep.subr.mxu0 0.0
    %837 = vmatpush2.msra.mxu0 0.0
    %838 = vmatprep.mubr.f32.mxu0 0.0
    %839 = vmatmul.mubr.f32.gmra.mxu0 %v772
    %v840 = vpop.f32.mrf.mxu0
    %v841 = vadd.f32 0.0, %v840
    %v842 = vpop.f32.mrf.mxu0
    %843 = vdwg.mxu0
    %v844 = vadd.f32 %v770, %v841
    %v845 = vtanh.pop %v844
    %846 = vst.msk [vmem:[%s769] sm:$0xff] %vm215, %v845
    %847 = vst.msk [vmem:[#allocation9] sm:$0xff] %vm215, %v845
    %v848 = vld [vmem:[%s4] sm:$0xff]
    %v849 = vld [vmem:[%s4 + $0x8] sm:$0xff]
    %v850 = vld [vmem:[%s4 + $0x10] sm:$0xff]
    %v851 = vld [vmem:[%s4 + $0x18] sm:$0xff]
    %v852 = vld [vmem:[#allocation3] sm:$0xff]
    %v853 = vld [vmem:[#allocation3 + $0x8] sm:$0xff]
    %v854 = vld [vmem:[#allocation3 + $0x10] sm:$0xff]
    %v855 = vld [vmem:[#allocation3 + $0x18] sm:$0xff]
    %v856 = vld [vmem:[%s6] sm:$0x1]
    %v857 = vld [vmem:[#allocation2] sm:$0xff]
    %v858 = vld [vmem:[#allocation2 + $0x8] sm:$0xff]
    %v859 = vld [vmem:[#allocation2 + $0x10] sm:$0xff]
    %v860 = vld [vmem:[#allocation2 + $0x18] sm:$0xff]
    %v861 = vld [vmem:[#allocation2 + $0x20] sm:$0xff]
    %v862 = vld [vmem:[#allocation2 + $0x28] sm:$0xff]
    %v863 = vld [vmem:[#allocation2 + $0x30] sm:$0xff]
    %v864 = vld [vmem:[#allocation2 + $0x38] sm:$0xff]
    %v866 = vlaneseq
    %v867 = vshrl.u32 %v866, 7
    %v868 = vsub.s32 0, %v867
    %v869 = vrot.slane %v856, %v868
    %v872 = vsel %vm215, %v857, 0
    %v875 = vsel %vm215, %v858, 0
    %v878 = vsel %vm215, %v859, 0
    %v881 = vsel %vm215, %v860, 0
    %v884 = vsel %vm215, %v861, 0
    %v887 = vsel %vm215, %v862, 0
    %v890 = vsel %vm215, %v863, 0
    %v893 = vsel %vm215, %v864, 0
    %895 = vmatprep.subr.mxu0 0.0
    %896 = vmatpush1.msra.mxu0 0.0
    %897 = vmatprep.subr.mxu0 0.0
    %898 = vmatpush1.msra.mxu0 0.0
    %899 = vmatprep.subr.mxu0 0.0
    %900 = vmatpush1.msra.mxu0 0.0
    %901 = vmatprep.subr.mxu0 0.0
    %902 = vmatpush1.msra.mxu0 0.0
    %903 = vmatprep.subr.mxu0 0.0
    %904 = vmatpush1.msra.mxu0 0.0
    %905 = vmatprep.subr.mxu0 0.0
    %906 = vmatpush1.msra.mxu0 0.0
    %907 = vmatprep.subr.mxu0 0.0
    %908 = vmatpush1.msra.mxu0 0.0
    %909 = vmatprep.subr.mxu0 0.0
    %910 = vmatpush1.msra.mxu0 0.0
    %911 = vmatprep.subr.mxu0 0.0
    %912 = vmatpush1.msra.mxu0 0.0
    %913 = vmatprep.subr.mxu0 0.0
    %914 = vmatpush1.msra.mxu0 0.0
    %915 = vmatprep.subr.mxu0 0.0
    %916 = vmatpush1.msra.mxu0 0.0
    %917 = vmatprep.subr.mxu0 0.0
    %918 = vmatpush1.msra.mxu0 0.0
    %919 = vmatprep.subr.mxu0 0.0
    %920 = vmatpush1.msra.mxu0 %v851
    %921 = vmatprep.subr.mxu0 0.0
    %922 = vmatpush1.msra.mxu0 %v850
    %923 = vmatprep.subr.mxu0 0.0
    %924 = vmatpush1.msra.mxu0 %v849
    %925 = vmatprep.subr.mxu0 0.0
    %926 = vmatpush1.msra.mxu0 %v848
    %927 = vmatprep.subr.mxu0 0.0
    %928 = vmatpush2.msra.mxu0 0.0
    %929 = vmatprep.subr.mxu0 0.0
    %930 = vmatpush2.msra.mxu0 0.0
    %931 = vmatprep.subr.mxu0 0.0
    %932 = vmatpush2.msra.mxu0 0.0
    %933 = vmatprep.subr.mxu0 0.0
    %934 = vmatpush2.msra.mxu0 0.0
    %935 = vmatprep.subr.mxu0 0.0
    %936 = vmatpush2.msra.mxu0 0.0
    %937 = vmatprep.subr.mxu0 0.0
    %938 = vmatpush2.msra.mxu0 0.0
    %939 = vmatprep.subr.mxu0 0.0
    %940 = vmatpush2.msra.mxu0 0.0
    %941 = vmatprep.subr.mxu0 0.0
    %942 = vmatpush2.msra.mxu0 0.0
    %943 = vmatprep.subr.mxu0 0.0
    %944 = vmatpush2.msra.mxu0 0.0
    %945 = vmatprep.subr.mxu0 0.0
    %946 = vmatpush2.msra.mxu0 0.0
    %947 = vmatprep.subr.mxu0 0.0
    %948 = vmatpush2.msra.mxu0 0.0
    %949 = vmatprep.subr.mxu0 0.0
    %950 = vmatpush2.msra.mxu0 0.0
    %951 = vmatprep.subr.mxu0 0.0
    %952 = vmatpush2.msra.mxu0 0.0
    %953 = vmatprep.subr.mxu0 0.0
    %954 = vmatpush2.msra.mxu0 0.0
    %955 = vmatprep.subr.mxu0 0.0
    %956 = vmatpush2.msra.mxu0 0.0
    %957 = vmatprep.subr.mxu0 0.0
    %958 = vmatpush2.msra.mxu0 0.0
    %959 = vmatprep.mubr.f32.mxu0 0.0
    %960 = vmatmul.mubr.f32.gmra.mxu0 %v872
    %v961 = vpop.f32.mrf.mxu0
    %v962 = vadd.f32 %v869, %v961
    %v963 = vpop.f32.mrf.mxu0
    %964 = vmatprep.mubr.f32.mxu0 0.0
    %965 = vmatmul.mubr.f32.gmra.mxu0 %v875
    %v966 = vpop.f32.mrf.mxu0
    %v967 = vadd.f32 %v869, %v966
    %v968 = vpop.f32.mrf.mxu0
    %969 = vmatprep.mubr.f32.mxu0 0.0
    %970 = vmatmul.mubr.f32.gmra.mxu0 %v878
    %v971 = vpop.f32.mrf.mxu0
    %v972 = vadd.f32 %v869, %v971
    %v973 = vpop.f32.mrf.mxu0
    %974 = vmatprep.mubr.f32.mxu0 0.0
    %975 = vmatmul.mubr.f32.gmra.mxu0 %v881
    %v976 = vpop.f32.mrf.mxu0
    %v977 = vadd.f32 %v869, %v976
    %v978 = vpop.f32.mrf.mxu0
    %979 = vmatprep.mubr.f32.mxu0 0.0
    %980 = vmatmul.mubr.f32.gmra.mxu0 %v884
    %v981 = vpop.f32.mrf.mxu0
    %v982 = vadd.f32 %v869, %v981
    %v983 = vpop.f32.mrf.mxu0
    %984 = vmatprep.mubr.f32.mxu0 0.0
    %985 = vmatmul.mubr.f32.gmra.mxu0 %v887
    %v986 = vpop.f32.mrf.mxu0
    %v987 = vadd.f32 %v869, %v986
    %v988 = vpop.f32.mrf.mxu0
    %989 = vmatprep.mubr.f32.mxu0 0.0
    %990 = vmatmul.mubr.f32.gmra.mxu0 %v890
    %v991 = vpop.f32.mrf.mxu0
    %v992 = vadd.f32 %v869, %v991
    %v993 = vpop.f32.mrf.mxu0
    %994 = vmatprep.mubr.f32.mxu0 0.0
    %995 = vmatmul.mubr.f32.gmra.mxu0 %v893
    %v996 = vpop.f32.mrf.mxu0
    %v997 = vadd.f32 %v869, %v996
    %v998 = vpop.f32.mrf.mxu0
    %999 = vdwg.mxu0
    %1000 = vst.msk [vmem:[#allocation2] sm:$0xff] %vm215, %v962
    %1001 = vst.msk [vmem:[#allocation2 + $0x8] sm:$0xff] %vm215, %v967
    %1002 = vst.msk [vmem:[#allocation2 + $0x10] sm:$0xff] %vm215, %v972
    %1003 = vst.msk [vmem:[#allocation2 + $0x18] sm:$0xff] %vm215, %v977
    %1004 = vst.msk [vmem:[#allocation2 + $0x20] sm:$0xff] %vm215, %v982
    %1005 = vst.msk [vmem:[#allocation2 + $0x28] sm:$0xff] %vm215, %v987
    %1006 = vst.msk [vmem:[#allocation2 + $0x30] sm:$0xff] %vm215, %v992
    %1007 = vst.msk [vmem:[#allocation2 + $0x38] sm:$0xff] %vm215, %v997
    %v1008 = vld [vmem:[#allocation2] sm:$0xff]
    %1009 = vmatprep.subr.mxu0 0.0
    %1010 = vmatpush1.msra.mxu0 0.0
    %1011 = vmatprep.subr.mxu0 0.0
    %1012 = vmatpush1.msra.mxu0 0.0
    %1013 = vmatprep.subr.mxu0 0.0
    %1014 = vmatpush1.msra.mxu0 0.0
    %1015 = vmatprep.subr.mxu0 0.0
    %1016 = vmatpush1.msra.mxu0 0.0
    %1017 = vmatprep.subr.mxu0 0.0
    %1018 = vmatpush1.msra.mxu0 0.0
    %1019 = vmatprep.subr.mxu0 0.0
    %1020 = vmatpush1.msra.mxu0 0.0
    %1021 = vmatprep.subr.mxu0 0.0
    %1022 = vmatpush1.msra.mxu0 0.0
    %1023 = vmatprep.subr.mxu0 0.0
    %1024 = vmatpush1.msra.mxu0 0.0
    %1025 = vmatprep.subr.mxu0 0.0
    %1026 = vmatpush1.msra.mxu0 0.0
    %1027 = vmatprep.subr.mxu0 0.0
    %1028 = vmatpush1.msra.mxu0 0.0
    %1029 = vmatprep.subr.mxu0 0.0
    %1030 = vmatpush1.msra.mxu0 0.0
    %1031 = vmatprep.subr.mxu0 0.0
    %1032 = vmatpush1.msra.mxu0 0.0
    %1033 = vmatprep.subr.mxu0 0.0
    %1034 = vmatpush1.msra.mxu0 %v855
    %1035 = vmatprep.subr.mxu0 0.0
    %1036 = vmatpush1.msra.mxu0 %v854
    %1037 = vmatprep.subr.mxu0 0.0
    %1038 = vmatpush1.msra.mxu0 %v853
    %1039 = vmatprep.subr.mxu0 0.0
    %1040 = vmatpush1.msra.mxu0 %v852
    %1041 = vmatprep.subr.mxu0 0.0
    %1042 = vmatpush2.msra.mxu0 0.0
    %1043 = vmatprep.subr.mxu0 0.0
    %1044 = vmatpush2.msra.mxu0 0.0
    %1045 = vmatprep.subr.mxu0 0.0
    %1046 = vmatpush2.msra.mxu0 0.0
    %1047 = vmatprep.subr.mxu0 0.0
    %1048 = vmatpush2.msra.mxu0 0.0
    %1049 = vmatprep.subr.mxu0 0.0
    %1050 = vmatpush2.msra.mxu0 0.0
    %1051 = vmatprep.subr.mxu0 0.0
    %1052 = vmatpush2.msra.mxu0 0.0
    %1053 = vmatprep.subr.mxu0 0.0
    %1054 = vmatpush2.msra.mxu0 0.0
    %1055 = vmatprep.subr.mxu0 0.0
    %1056 = vmatpush2.msra.mxu0 0.0
    %1057 = vmatprep.subr.mxu0 0.0
    %1058 = vmatpush2.msra.mxu0 0.0
    %1059 = vmatprep.subr.mxu0 0.0
    %1060 = vmatpush2.msra.mxu0 0.0
    %1061 = vmatprep.subr.mxu0 0.0
    %1062 = vmatpush2.msra.mxu0 0.0
    %1063 = vmatprep.subr.mxu0 0.0
    %1064 = vmatpush2.msra.mxu0 0.0
    %1065 = vmatprep.subr.mxu0 0.0
    %1066 = vmatpush2.msra.mxu0 0.0
    %1067 = vmatprep.subr.mxu0 0.0
    %1068 = vmatpush2.msra.mxu0 0.0
    %1069 = vmatprep.subr.mxu0 0.0
    %1070 = vmatpush2.msra.mxu0 0.0
    %1071 = vmatprep.subr.mxu0 0.0
    %1072 = vmatpush2.msra.mxu0 0.0
    %1073 = vmatprep.mubr.f32.mxu0 0.0
    %1074 = vmatmul.mubr.f32.gmra.mxu0 %v226
    %v1075 = vpop.f32.mrf.mxu0
    %v1076 = vadd.f32 0.0, %v1075
    %v1077 = vpop.f32.mrf.mxu0
    %1078 = vdwg.mxu0
    %v1079 = vadd.f32 %v1008, %v1076
    %v1080 = vtanh.pop %v1079
    %1081 = vst.msk [vmem:[#allocation2] sm:$0xff] %vm215, %v1080
    %v1082 = vld [vmem:[%s301] sm:$0xff]
    %v1084 = vsel %vm215, %v1080, 0
    %1086 = vmatprep.subr.mxu0 0.0
    %1087 = vmatpush1.msra.mxu0 0.0
    %1088 = vmatprep.subr.mxu0 0.0
    %1089 = vmatpush1.msra.mxu0 0.0
    %1090 = vmatprep.subr.mxu0 0.0
    %1091 = vmatpush1.msra.mxu0 0.0
    %1092 = vmatprep.subr.mxu0 0.0
    %1093 = vmatpush1.msra.mxu0 0.0
    %1094 = vmatprep.subr.mxu0 0.0
    %1095 = vmatpush1.msra.mxu0 0.0
    %1096 = vmatprep.subr.mxu0 0.0
    %1097 = vmatpush1.msra.mxu0 0.0
    %1098 = vmatprep.subr.mxu0 0.0
    %1099 = vmatpush1.msra.mxu0 0.0
    %1100 = vmatprep.subr.mxu0 0.0
    %1101 = vmatpush1.msra.mxu0 0.0
    %1102 = vmatprep.subr.mxu0 0.0
    %1103 = vmatpush1.msra.mxu0 0.0
    %1104 = vmatprep.subr.mxu0 0.0
    %1105 = vmatpush1.msra.mxu0 0.0
    %1106 = vmatprep.subr.mxu0 0.0
    %1107 = vmatpush1.msra.mxu0 0.0
    %1108 = vmatprep.subr.mxu0 0.0
    %1109 = vmatpush1.msra.mxu0 0.0
    %1110 = vmatprep.subr.mxu0 0.0
    %1111 = vmatpush1.msra.mxu0 %v855
    %1112 = vmatprep.subr.mxu0 0.0
    %1113 = vmatpush1.msra.mxu0 %v854
    %1114 = vmatprep.subr.mxu0 0.0
    %1115 = vmatpush1.msra.mxu0 %v853
    %1116 = vmatprep.subr.mxu0 0.0
    %1117 = vmatpush1.msra.mxu0 %v852
    %1118 = vmatprep.subr.mxu0 0.0
    %1119 = vmatpush2.msra.mxu0 0.0
    %1120 = vmatprep.subr.mxu0 0.0
    %1121 = vmatpush2.msra.mxu0 0.0
    %1122 = vmatprep.subr.mxu0 0.0
    %1123 = vmatpush2.msra.mxu0 0.0
    %1124 = vmatprep.subr.mxu0 0.0
    %1125 = vmatpush2.msra.mxu0 0.0
    %1126 = vmatprep.subr.mxu0 0.0
    %1127 = vmatpush2.msra.mxu0 0.0
    %1128 = vmatprep.subr.mxu0 0.0
    %1129 = vmatpush2.msra.mxu0 0.0
    %1130 = vmatprep.subr.mxu0 0.0
    %1131 = vmatpush2.msra.mxu0 0.0
    %1132 = vmatprep.subr.mxu0 0.0
    %1133 = vmatpush2.msra.mxu0 0.0
    %1134 = vmatprep.subr.mxu0 0.0
    %1135 = vmatpush2.msra.mxu0 0.0
    %1136 = vmatprep.subr.mxu0 0.0
    %1137 = vmatpush2.msra.mxu0 0.0
    %1138 = vmatprep.subr.mxu0 0.0
    %1139 = vmatpush2.msra.mxu0 0.0
    %1140 = vmatprep.subr.mxu0 0.0
    %1141 = vmatpush2.msra.mxu0 0.0
    %1142 = vmatprep.subr.mxu0 0.0
    %1143 = vmatpush2.msra.mxu0 0.0
    %1144 = vmatprep.subr.mxu0 0.0
    %1145 = vmatpush2.msra.mxu0 0.0
    %1146 = vmatprep.subr.mxu0 0.0
    %1147 = vmatpush2.msra.mxu0 0.0
    %1148 = vmatprep.subr.mxu0 0.0
    %1149 = vmatpush2.msra.mxu0 0.0
    %1150 = vmatprep.mubr.f32.mxu0 0.0
    %1151 = vmatmul.mubr.f32.gmra.mxu0 %v1084
    %v1152 = vpop.f32.mrf.mxu0
    %v1153 = vadd.f32 0.0, %v1152
    %v1154 = vpop.f32.mrf.mxu0
    %1155 = vdwg.mxu0
    %v1156 = vadd.f32 %v1082, %v1153
    %v1157 = vtanh.pop %v1156
    %1158 = vst.msk [vmem:[%s301] sm:$0xff] %vm215, %v1157
    %v1159 = vld [vmem:[%s379] sm:$0xff]
    %v1161 = vsel %vm215, %v1157, 0
    %1163 = vmatprep.subr.mxu0 0.0
    %1164 = vmatpush1.msra.mxu0 0.0
    %1165 = vmatprep.subr.mxu0 0.0
    %1166 = vmatpush1.msra.mxu0 0.0
    %1167 = vmatprep.subr.mxu0 0.0
    %1168 = vmatpush1.msra.mxu0 0.0
    %1169 = vmatprep.subr.mxu0 0.0
    %1170 = vmatpush1.msra.mxu0 0.0
    %1171 = vmatprep.subr.mxu0 0.0
    %1172 = vmatpush1.msra.mxu0 0.0
    %1173 = vmatprep.subr.mxu0 0.0
    %1174 = vmatpush1.msra.mxu0 0.0
    %1175 = vmatprep.subr.mxu0 0.0
    %1176 = vmatpush1.msra.mxu0 0.0
    %1177 = vmatprep.subr.mxu0 0.0
    %1178 = vmatpush1.msra.mxu0 0.0
    %1179 = vmatprep.subr.mxu0 0.0
    %1180 = vmatpush1.msra.mxu0 0.0
    %1181 = vmatprep.subr.mxu0 0.0
    %1182 = vmatpush1.msra.mxu0 0.0
    %1183 = vmatprep.subr.mxu0 0.0
    %1184 = vmatpush1.msra.mxu0 0.0
    %1185 = vmatprep.subr.mxu0 0.0
    %1186 = vmatpush1.msra.mxu0 0.0
    %1187 = vmatprep.subr.mxu0 0.0
    %1188 = vmatpush1.msra.mxu0 %v855
    %1189 = vmatprep.subr.mxu0 0.0
    %1190 = vmatpush1.msra.mxu0 %v854
    %1191 = vmatprep.subr.mxu0 0.0
    %1192 = vmatpush1.msra.mxu0 %v853
    %1193 = vmatprep.subr.mxu0 0.0
    %1194 = vmatpush1.msra.mxu0 %v852
    %1195 = vmatprep.subr.mxu0 0.0
    %1196 = vmatpush2.msra.mxu0 0.0
    %1197 = vmatprep.subr.mxu0 0.0
    %1198 = vmatpush2.msra.mxu0 0.0
    %1199 = vmatprep.subr.mxu0 0.0
    %1200 = vmatpush2.msra.mxu0 0.0
    %1201 = vmatprep.subr.mxu0 0.0
    %1202 = vmatpush2.msra.mxu0 0.0
    %1203 = vmatprep.subr.mxu0 0.0
    %1204 = vmatpush2.msra.mxu0 0.0
    %1205 = vmatprep.subr.mxu0 0.0
    %1206 = vmatpush2.msra.mxu0 0.0
    %1207 = vmatprep.subr.mxu0 0.0
    %1208 = vmatpush2.msra.mxu0 0.0
    %1209 = vmatprep.subr.mxu0 0.0
    %1210 = vmatpush2.msra.mxu0 0.0
    %1211 = vmatprep.subr.mxu0 0.0
    %1212 = vmatpush2.msra.mxu0 0.0
    %1213 = vmatprep.subr.mxu0 0.0
    %1214 = vmatpush2.msra.mxu0 0.0
    %1215 = vmatprep.subr.mxu0 0.0
    %1216 = vmatpush2.msra.mxu0 0.0
    %1217 = vmatprep.subr.mxu0 0.0
    %1218 = vmatpush2.msra.mxu0 0.0
    %1219 = vmatprep.subr.mxu0 0.0
    %1220 = vmatpush2.msra.mxu0 0.0
    %1221 = vmatprep.subr.mxu0 0.0
    %1222 = vmatpush2.msra.mxu0 0.0
    %1223 = vmatprep.subr.mxu0 0.0
    %1224 = vmatpush2.msra.mxu0 0.0
    %1225 = vmatprep.subr.mxu0 0.0
    %1226 = vmatpush2.msra.mxu0 0.0
    %1227 = vmatprep.mubr.f32.mxu0 0.0
    %1228 = vmatmul.mubr.f32.gmra.mxu0 %v1161
    %v1229 = vpop.f32.mrf.mxu0
    %v1230 = vadd.f32 0.0, %v1229
    %v1231 = vpop.f32.mrf.mxu0
    %1232 = vdwg.mxu0
    %v1233 = vadd.f32 %v1159, %v1230
    %v1234 = vtanh.pop %v1233
    %1235 = vst.msk [vmem:[%s379] sm:$0xff] %vm215, %v1234
    %v1236 = vld [vmem:[%s457] sm:$0xff]
    %v1238 = vsel %vm215, %v1234, 0
    %1240 = vmatprep.subr.mxu0 0.0
    %1241 = vmatpush1.msra.mxu0 0.0
    %1242 = vmatprep.subr.mxu0 0.0
    %1243 = vmatpush1.msra.mxu0 0.0
    %1244 = vmatprep.subr.mxu0 0.0
    %1245 = vmatpush1.msra.mxu0 0.0
    %1246 = vmatprep.subr.mxu0 0.0
    %1247 = vmatpush1.msra.mxu0 0.0
    %1248 = vmatprep.subr.mxu0 0.0
    %1249 = vmatpush1.msra.mxu0 0.0
    %1250 = vmatprep.subr.mxu0 0.0
    %1251 = vmatpush1.msra.mxu0 0.0
    %1252 = vmatprep.subr.mxu0 0.0
    %1253 = vmatpush1.msra.mxu0 0.0
    %1254 = vmatprep.subr.mxu0 0.0
    %1255 = vmatpush1.msra.mxu0 0.0
    %1256 = vmatprep.subr.mxu0 0.0
    %1257 = vmatpush1.msra.mxu0 0.0
    %1258 = vmatprep.subr.mxu0 0.0
    %1259 = vmatpush1.msra.mxu0 0.0
    %1260 = vmatprep.subr.mxu0 0.0
    %1261 = vmatpush1.msra.mxu0 0.0
    %1262 = vmatprep.subr.mxu0 0.0
    %1263 = vmatpush1.msra.mxu0 0.0
    %1264 = vmatprep.subr.mxu0 0.0
    %1265 = vmatpush1.msra.mxu0 %v855
    %1266 = vmatprep.subr.mxu0 0.0
    %1267 = vmatpush1.msra.mxu0 %v854
    %1268 = vmatprep.subr.mxu0 0.0
    %1269 = vmatpush1.msra.mxu0 %v853
    %1270 = vmatprep.subr.mxu0 0.0
    %1271 = vmatpush1.msra.mxu0 %v852
    %1272 = vmatprep.subr.mxu0 0.0
    %1273 = vmatpush2.msra.mxu0 0.0
    %1274 = vmatprep.subr.mxu0 0.0
    %1275 = vmatpush2.msra.mxu0 0.0
    %1276 = vmatprep.subr.mxu0 0.0
    %1277 = vmatpush2.msra.mxu0 0.0
    %1278 = vmatprep.subr.mxu0 0.0
    %1279 = vmatpush2.msra.mxu0 0.0
    %1280 = vmatprep.subr.mxu0 0.0
    %1281 = vmatpush2.msra.mxu0 0.0
    %1282 = vmatprep.subr.mxu0 0.0
    %1283 = vmatpush2.msra.mxu0 0.0
    %1284 = vmatprep.subr.mxu0 0.0
    %1285 = vmatpush2.msra.mxu0 0.0
    %1286 = vmatprep.subr.mxu0 0.0
    %1287 = vmatpush2.msra.mxu0 0.0
    %1288 = vmatprep.subr.mxu0 0.0
    %1289 = vmatpush2.msra.mxu0 0.0
    %1290 = vmatprep.subr.mxu0 0.0
    %1291 = vmatpush2.msra.mxu0 0.0
    %1292 = vmatprep.subr.mxu0 0.0
    %1293 = vmatpush2.msra.mxu0 0.0
    %1294 = vmatprep.subr.mxu0 0.0
    %1295 = vmatpush2.msra.mxu0 0.0
    %1296 = vmatprep.subr.mxu0 0.0
    %1297 = vmatpush2.msra.mxu0 0.0
    %1298 = vmatprep.subr.mxu0 0.0
    %1299 = vmatpush2.msra.mxu0 0.0
    %1300 = vmatprep.subr.mxu0 0.0
    %1301 = vmatpush2.msra.mxu0 0.0
    %1302 = vmatprep.subr.mxu0 0.0
    %1303 = vmatpush2.msra.mxu0 0.0
    %1304 = vmatprep.mubr.f32.mxu0 0.0
    %1305 = vmatmul.mubr.f32.gmra.mxu0 %v1238
    %v1306 = vpop.f32.mrf.mxu0
    %v1307 = vadd.f32 0.0, %v1306
    %v1308 = vpop.f32.mrf.mxu0
    %1309 = vdwg.mxu0
    %v1310 = vadd.f32 %v1236, %v1307
    %v1311 = vtanh.pop %v1310
    %1312 = vst.msk [vmem:[%s457] sm:$0xff] %vm215, %v1311
    %v1313 = vld [vmem:[%s535] sm:$0xff]
    %v1315 = vsel %vm215, %v1311, 0
    %1317 = vmatprep.subr.mxu0 0.0
    %1318 = vmatpush1.msra.mxu0 0.0
    %1319 = vmatprep.subr.mxu0 0.0
    %1320 = vmatpush1.msra.mxu0 0.0
    %1321 = vmatprep.subr.mxu0 0.0
    %1322 = vmatpush1.msra.mxu0 0.0
    %1323 = vmatprep.subr.mxu0 0.0
    %1324 = vmatpush1.msra.mxu0 0.0
    %1325 = vmatprep.subr.mxu0 0.0
    %1326 = vmatpush1.msra.mxu0 0.0
    %1327 = vmatprep.subr.mxu0 0.0
    %1328 = vmatpush1.msra.mxu0 0.0
    %1329 = vmatprep.subr.mxu0 0.0
    %1330 = vmatpush1.msra.mxu0 0.0
    %1331 = vmatprep.subr.mxu0 0.0
    %1332 = vmatpush1.msra.mxu0 0.0
    %1333 = vmatprep.subr.mxu0 0.0
    %1334 = vmatpush1.msra.mxu0 0.0
    %1335 = vmatprep.subr.mxu0 0.0
    %1336 = vmatpush1.msra.mxu0 0.0
    %1337 = vmatprep.subr.mxu0 0.0
    %1338 = vmatpush1.msra.mxu0 0.0
    %1339 = vmatprep.subr.mxu0 0.0
    %1340 = vmatpush1.msra.mxu0 0.0
    %1341 = vmatprep.subr.mxu0 0.0
    %1342 = vmatpush1.msra.mxu0 %v855
    %1343 = vmatprep.subr.mxu0 0.0
    %1344 = vmatpush1.msra.mxu0 %v854
    %1345 = vmatprep.subr.mxu0 0.0
    %1346 = vmatpush1.msra.mxu0 %v853
    %1347 = vmatprep.subr.mxu0 0.0
    %1348 = vmatpush1.msra.mxu0 %v852
    %1349 = vmatprep.subr.mxu0 0.0
    %1350 = vmatpush2.msra.mxu0 0.0
    %1351 = vmatprep.subr.mxu0 0.0
    %1352 = vmatpush2.msra.mxu0 0.0
    %1353 = vmatprep.subr.mxu0 0.0
    %1354 = vmatpush2.msra.mxu0 0.0
    %1355 = vmatprep.subr.mxu0 0.0
    %1356 = vmatpush2.msra.mxu0 0.0
    %1357 = vmatprep.subr.mxu0 0.0
    %1358 = vmatpush2.msra.mxu0 0.0
    %1359 = vmatprep.subr.mxu0 0.0
    %1360 = vmatpush2.msra.mxu0 0.0
    %1361 = vmatprep.subr.mxu0 0.0
    %1362 = vmatpush2.msra.mxu0 0.0
    %1363 = vmatprep.subr.mxu0 0.0
    %1364 = vmatpush2.msra.mxu0 0.0
    %1365 = vmatprep.subr.mxu0 0.0
    %1366 = vmatpush2.msra.mxu0 0.0
    %1367 = vmatprep.subr.mxu0 0.0
    %1368 = vmatpush2.msra.mxu0 0.0
    %1369 = vmatprep.subr.mxu0 0.0
    %1370 = vmatpush2.msra.mxu0 0.0
    %1371 = vmatprep.subr.mxu0 0.0
    %1372 = vmatpush2.msra.mxu0 0.0
    %1373 = vmatprep.subr.mxu0 0.0
    %1374 = vmatpush2.msra.mxu0 0.0
    %1375 = vmatprep.subr.mxu0 0.0
    %1376 = vmatpush2.msra.mxu0 0.0
    %1377 = vmatprep.subr.mxu0 0.0
    %1378 = vmatpush2.msra.mxu0 0.0
    %1379 = vmatprep.subr.mxu0 0.0
    %1380 = vmatpush2.msra.mxu0 0.0
    %1381 = vmatprep.mubr.f32.mxu0 0.0
    %1382 = vmatmul.mubr.f32.gmra.mxu0 %v1315
    %v1383 = vpop.f32.mrf.mxu0
    %v1384 = vadd.f32 0.0, %v1383
    %v1385 = vpop.f32.mrf.mxu0
    %1386 = vdwg.mxu0
    %v1387 = vadd.f32 %v1313, %v1384
    %v1388 = vtanh.pop %v1387
    %1389 = vst.msk [vmem:[%s535] sm:$0xff] %vm215, %v1388
    %v1390 = vld [vmem:[%s613] sm:$0xff]
    %v1392 = vsel %vm215, %v1388, 0
    %1394 = vmatprep.subr.mxu0 0.0
    %1395 = vmatpush1.msra.mxu0 0.0
    %1396 = vmatprep.subr.mxu0 0.0
    %1397 = vmatpush1.msra.mxu0 0.0
    %1398 = vmatprep.subr.mxu0 0.0
    %1399 = vmatpush1.msra.mxu0 0.0
    %1400 = vmatprep.subr.mxu0 0.0
    %1401 = vmatpush1.msra.mxu0 0.0
    %1402 = vmatprep.subr.mxu0 0.0
    %1403 = vmatpush1.msra.mxu0 0.0
    %1404 = vmatprep.subr.mxu0 0.0
    %1405 = vmatpush1.msra.mxu0 0.0
    %1406 = vmatprep.subr.mxu0 0.0
    %1407 = vmatpush1.msra.mxu0 0.0
    %1408 = vmatprep.subr.mxu0 0.0
    %1409 = vmatpush1.msra.mxu0 0.0
    %1410 = vmatprep.subr.mxu0 0.0
    %1411 = vmatpush1.msra.mxu0 0.0
    %1412 = vmatprep.subr.mxu0 0.0
    %1413 = vmatpush1.msra.mxu0 0.0
    %1414 = vmatprep.subr.mxu0 0.0
    %1415 = vmatpush1.msra.mxu0 0.0
    %1416 = vmatprep.subr.mxu0 0.0
    %1417 = vmatpush1.msra.mxu0 0.0
    %1418 = vmatprep.subr.mxu0 0.0
    %1419 = vmatpush1.msra.mxu0 %v855
    %1420 = vmatprep.subr.mxu0 0.0
    %1421 = vmatpush1.msra.mxu0 %v854
    %1422 = vmatprep.subr.mxu0 0.0
    %1423 = vmatpush1.msra.mxu0 %v853
    %1424 = vmatprep.subr.mxu0 0.0
    %1425 = vmatpush1.msra.mxu0 %v852
    %1426 = vmatprep.subr.mxu0 0.0
    %1427 = vmatpush2.msra.mxu0 0.0
    %1428 = vmatprep.subr.mxu0 0.0
    %1429 = vmatpush2.msra.mxu0 0.0
    %1430 = vmatprep.subr.mxu0 0.0
    %1431 = vmatpush2.msra.mxu0 0.0
    %1432 = vmatprep.subr.mxu0 0.0
    %1433 = vmatpush2.msra.mxu0 0.0
    %1434 = vmatprep.subr.mxu0 0.0
    %1435 = vmatpush2.msra.mxu0 0.0
    %1436 = vmatprep.subr.mxu0 0.0
    %1437 = vmatpush2.msra.mxu0 0.0
    %1438 = vmatprep.subr.mxu0 0.0
    %1439 = vmatpush2.msra.mxu0 0.0
    %1440 = vmatprep.subr.mxu0 0.0
    %1441 = vmatpush2.msra.mxu0 0.0
    %1442 = vmatprep.subr.mxu0 0.0
    %1443 = vmatpush2.msra.mxu0 0.0
    %1444 = vmatprep.subr.mxu0 0.0
    %1445 = vmatpush2.msra.mxu0 0.0
    %1446 = vmatprep.subr.mxu0 0.0
    %1447 = vmatpush2.msra.mxu0 0.0
    %1448 = vmatprep.subr.mxu0 0.0
    %1449 = vmatpush2.msra.mxu0 0.0
    %1450 = vmatprep.subr.mxu0 0.0
    %1451 = vmatpush2.msra.mxu0 0.0
    %1452 = vmatprep.subr.mxu0 0.0
    %1453 = vmatpush2.msra.mxu0 0.0
    %1454 = vmatprep.subr.mxu0 0.0
    %1455 = vmatpush2.msra.mxu0 0.0
    %1456 = vmatprep.subr.mxu0 0.0
    %1457 = vmatpush2.msra.mxu0 0.0
    %1458 = vmatprep.mubr.f32.mxu0 0.0
    %1459 = vmatmul.mubr.f32.gmra.mxu0 %v1392
    %v1460 = vpop.f32.mrf.mxu0
    %v1461 = vadd.f32 0.0, %v1460
    %v1462 = vpop.f32.mrf.mxu0
    %1463 = vdwg.mxu0
    %v1464 = vadd.f32 %v1390, %v1461
    %v1465 = vtanh.pop %v1464
    %1466 = vst.msk [vmem:[%s613] sm:$0xff] %vm215, %v1465
    %v1467 = vld [vmem:[%s691] sm:$0xff]
    %v1469 = vsel %vm215, %v1465, 0
    %1471 = vmatprep.subr.mxu0 0.0
    %1472 = vmatpush1.msra.mxu0 0.0
    %1473 = vmatprep.subr.mxu0 0.0
    %1474 = vmatpush1.msra.mxu0 0.0
    %1475 = vmatprep.subr.mxu0 0.0
    %1476 = vmatpush1.msra.mxu0 0.0
    %1477 = vmatprep.subr.mxu0 0.0
    %1478 = vmatpush1.msra.mxu0 0.0
    %1479 = vmatprep.subr.mxu0 0.0
    %1480 = vmatpush1.msra.mxu0 0.0
    %1481 = vmatprep.subr.mxu0 0.0
    %1482 = vmatpush1.msra.mxu0 0.0
    %1483 = vmatprep.subr.mxu0 0.0
    %1484 = vmatpush1.msra.mxu0 0.0
    %1485 = vmatprep.subr.mxu0 0.0
    %1486 = vmatpush1.msra.mxu0 0.0
    %1487 = vmatprep.subr.mxu0 0.0
    %1488 = vmatpush1.msra.mxu0 0.0
    %1489 = vmatprep.subr.mxu0 0.0
    %1490 = vmatpush1.msra.mxu0 0.0
    %1491 = vmatprep.subr.mxu0 0.0
    %1492 = vmatpush1.msra.mxu0 0.0
    %1493 = vmatprep.subr.mxu0 0.0
    %1494 = vmatpush1.msra.mxu0 0.0
    %1495 = vmatprep.subr.mxu0 0.0
    %1496 = vmatpush1.msra.mxu0 %v855
    %1497 = vmatprep.subr.mxu0 0.0
    %1498 = vmatpush1.msra.mxu0 %v854
    %1499 = vmatprep.subr.mxu0 0.0
    %1500 = vmatpush1.msra.mxu0 %v853
    %1501 = vmatprep.subr.mxu0 0.0
    %1502 = vmatpush1.msra.mxu0 %v852
    %1503 = vmatprep.subr.mxu0 0.0
    %1504 = vmatpush2.msra.mxu0 0.0
    %1505 = vmatprep.subr.mxu0 0.0
    %1506 = vmatpush2.msra.mxu0 0.0
    %1507 = vmatprep.subr.mxu0 0.0
    %1508 = vmatpush2.msra.mxu0 0.0
    %1509 = vmatprep.subr.mxu0 0.0
    %1510 = vmatpush2.msra.mxu0 0.0
    %1511 = vmatprep.subr.mxu0 0.0
    %1512 = vmatpush2.msra.mxu0 0.0
    %1513 = vmatprep.subr.mxu0 0.0
    %1514 = vmatpush2.msra.mxu0 0.0
    %1515 = vmatprep.subr.mxu0 0.0
    %1516 = vmatpush2.msra.mxu0 0.0
    %1517 = vmatprep.subr.mxu0 0.0
    %1518 = vmatpush2.msra.mxu0 0.0
    %1519 = vmatprep.subr.mxu0 0.0
    %1520 = vmatpush2.msra.mxu0 0.0
    %1521 = vmatprep.subr.mxu0 0.0
    %1522 = vmatpush2.msra.mxu0 0.0
    %1523 = vmatprep.subr.mxu0 0.0
    %1524 = vmatpush2.msra.mxu0 0.0
    %1525 = vmatprep.subr.mxu0 0.0
    %1526 = vmatpush2.msra.mxu0 0.0
    %1527 = vmatprep.subr.mxu0 0.0
    %1528 = vmatpush2.msra.mxu0 0.0
    %1529 = vmatprep.subr.mxu0 0.0
    %1530 = vmatpush2.msra.mxu0 0.0
    %1531 = vmatprep.subr.mxu0 0.0
    %1532 = vmatpush2.msra.mxu0 0.0
    %1533 = vmatprep.subr.mxu0 0.0
    %1534 = vmatpush2.msra.mxu0 0.0
    %1535 = vmatprep.mubr.f32.mxu0 0.0
    %1536 = vmatmul.mubr.f32.gmra.mxu0 %v1469
    %v1537 = vpop.f32.mrf.mxu0
    %v1538 = vadd.f32 0.0, %v1537
    %v1539 = vpop.f32.mrf.mxu0
    %1540 = vdwg.mxu0
    %v1541 = vadd.f32 %v1467, %v1538
    %v1542 = vtanh.pop %v1541
    %1543 = vst.msk [vmem:[%s691] sm:$0xff] %vm215, %v1542
    %v1544 = vld [vmem:[%s769] sm:$0xff]
    %v1546 = vsel %vm215, %v1542, 0
    %1548 = vmatprep.subr.mxu0 0.0
    %1549 = vmatpush1.msra.mxu0 0.0
    %1550 = vmatprep.subr.mxu0 0.0
    %1551 = vmatpush1.msra.mxu0 0.0
    %1552 = vmatprep.subr.mxu0 0.0
    %1553 = vmatpush1.msra.mxu0 0.0
    %1554 = vmatprep.subr.mxu0 0.0
    %1555 = vmatpush1.msra.mxu0 0.0
    %1556 = vmatprep.subr.mxu0 0.0
    %1557 = vmatpush1.msra.mxu0 0.0
    %1558 = vmatprep.subr.mxu0 0.0
    %1559 = vmatpush1.msra.mxu0 0.0
    %1560 = vmatprep.subr.mxu0 0.0
    %1561 = vmatpush1.msra.mxu0 0.0
    %1562 = vmatprep.subr.mxu0 0.0
    %1563 = vmatpush1.msra.mxu0 0.0
    %1564 = vmatprep.subr.mxu0 0.0
    %1565 = vmatpush1.msra.mxu0 0.0
    %1566 = vmatprep.subr.mxu0 0.0
    %1567 = vmatpush1.msra.mxu0 0.0
    %1568 = vmatprep.subr.mxu0 0.0
    %1569 = vmatpush1.msra.mxu0 0.0
    %1570 = vmatprep.subr.mxu0 0.0
    %1571 = vmatpush1.msra.mxu0 0.0
    %1572 = vmatprep.subr.mxu0 0.0
    %1573 = vmatpush1.msra.mxu0 %v855
    %1574 = vmatprep.subr.mxu0 0.0
    %1575 = vmatpush1.msra.mxu0 %v854
    %1576 = vmatprep.subr.mxu0 0.0
    %1577 = vmatpush1.msra.mxu0 %v853
    %1578 = vmatprep.subr.mxu0 0.0
    %1579 = vmatpush1.msra.mxu0 %v852
    %1580 = vmatprep.subr.mxu0 0.0
    %1581 = vmatpush2.msra.mxu0 0.0
    %1582 = vmatprep.subr.mxu0 0.0
    %1583 = vmatpush2.msra.mxu0 0.0
    %1584 = vmatprep.subr.mxu0 0.0
    %1585 = vmatpush2.msra.mxu0 0.0
    %1586 = vmatprep.subr.mxu0 0.0
    %1587 = vmatpush2.msra.mxu0 0.0
    %1588 = vmatprep.subr.mxu0 0.0
    %1589 = vmatpush2.msra.mxu0 0.0
    %1590 = vmatprep.subr.mxu0 0.0
    %1591 = vmatpush2.msra.mxu0 0.0
    %1592 = vmatprep.subr.mxu0 0.0
    %1593 = vmatpush2.msra.mxu0 0.0
    %1594 = vmatprep.subr.mxu0 0.0
    %1595 = vmatpush2.msra.mxu0 0.0
    %1596 = vmatprep.subr.mxu0 0.0
    %1597 = vmatpush2.msra.mxu0 0.0
    %1598 = vmatprep.subr.mxu0 0.0
    %1599 = vmatpush2.msra.mxu0 0.0
    %1600 = vmatprep.subr.mxu0 0.0
    %1601 = vmatpush2.msra.mxu0 0.0
    %1602 = vmatprep.subr.mxu0 0.0
    %1603 = vmatpush2.msra.mxu0 0.0
    %1604 = vmatprep.subr.mxu0 0.0
    %1605 = vmatpush2.msra.mxu0 0.0
    %1606 = vmatprep.subr.mxu0 0.0
    %1607 = vmatpush2.msra.mxu0 0.0
    %1608 = vmatprep.subr.mxu0 0.0
    %1609 = vmatpush2.msra.mxu0 0.0
    %1610 = vmatprep.subr.mxu0 0.0
    %1611 = vmatpush2.msra.mxu0 0.0
    %1612 = vmatprep.mubr.f32.mxu0 0.0
    %1613 = vmatmul.mubr.f32.gmra.mxu0 %v1546
    %v1614 = vpop.f32.mrf.mxu0
    %v1615 = vadd.f32 0.0, %v1614
    %v1616 = vpop.f32.mrf.mxu0
    %1617 = vdwg.mxu0
    %v1618 = vadd.f32 %v1544, %v1615
    %v1619 = vtanh.pop %v1618
    %1620 = vst.msk [vmem:[%s769] sm:$0xff] %vm215, %v1619
    %s1621 = scalar_lea.vmem [#allocation9], 8
    %1622 = vst.msk [vmem:[%s1621] sm:$0xff] %vm215, %v1619
    %v1623 = vld [vmem:[#allocation6] sm:$0xff]
    %v1624 = vld [vmem:[#allocation6 + $0x8] sm:$0xff]
    %v1625 = vld [vmem:[#allocation6 + $0x10] sm:$0xff]
    %v1626 = vld [vmem:[#allocation6 + $0x18] sm:$0xff]
    %v1627 = vld [vmem:[%s8] sm:$0x1]
    %v1628 = vld [vmem:[#allocation2] sm:$0xff]
    %v1629 = vld [vmem:[#allocation2 + $0x8] sm:$0xff]
    %v1630 = vld [vmem:[#allocation2 + $0x10] sm:$0xff]
    %v1631 = vld [vmem:[#allocation2 + $0x18] sm:$0xff]
    %v1632 = vld [vmem:[#allocation2 + $0x20] sm:$0xff]
    %v1633 = vld [vmem:[#allocation2 + $0x28] sm:$0xff]
    %v1634 = vld [vmem:[#allocation2 + $0x30] sm:$0xff]
    %v1635 = vld [vmem:[#allocation2 + $0x38] sm:$0xff]
    %v1637 = vlaneseq
    %v1638 = vshrl.u32 %v1637, 7
    %v1639 = vsub.s32 0, %v1638
    %v1640 = vrot.slane %v1627, %v1639
    %v1643 = vsel %vm215, %v1628, 0
    %v1646 = vsel %vm215, %v1629, 0
    %v1649 = vsel %vm215, %v1630, 0
    %v1652 = vsel %vm215, %v1631, 0
    %v1655 = vsel %vm215, %v1632, 0
    %v1658 = vsel %vm215, %v1633, 0
    %v1661 = vsel %vm215, %v1634, 0
    %v1664 = vsel %vm215, %v1635, 0
    %1666 = vmatprep.subr.mxu0 0.0
    %1667 = vmatpush1.msra.mxu0 0.0
    %1668 = vmatprep.subr.mxu0 0.0
    %1669 = vmatpush1.msra.mxu0 0.0
    %1670 = vmatprep.subr.mxu0 0.0
    %1671 = vmatpush1.msra.mxu0 0.0
    %1672 = vmatprep.subr.mxu0 0.0
    %1673 = vmatpush1.msra.mxu0 0.0
    %1674 = vmatprep.subr.mxu0 0.0
    %1675 = vmatpush1.msra.mxu0 0.0
    %1676 = vmatprep.subr.mxu0 0.0
    %1677 = vmatpush1.msra.mxu0 0.0
    %1678 = vmatprep.subr.mxu0 0.0
    %1679 = vmatpush1.msra.mxu0 0.0
    %1680 = vmatprep.subr.mxu0 0.0
    %1681 = vmatpush1.msra.mxu0 0.0
    %1682 = vmatprep.subr.mxu0 0.0
    %1683 = vmatpush1.msra.mxu0 0.0
    %1684 = vmatprep.subr.mxu0 0.0
    %1685 = vmatpush1.msra.mxu0 0.0
    %1686 = vmatprep.subr.mxu0 0.0
    %1687 = vmatpush1.msra.mxu0 0.0
    %1688 = vmatprep.subr.mxu0 0.0
    %1689 = vmatpush1.msra.mxu0 0.0
    %1690 = vmatprep.subr.mxu0 0.0
    %1691 = vmatpush1.msra.mxu0 %v1626
    %1692 = vmatprep.subr.mxu0 0.0
    %1693 = vmatpush1.msra.mxu0 %v1625
    %1694 = vmatprep.subr.mxu0 0.0
    %1695 = vmatpush1.msra.mxu0 %v1624
    %1696 = vmatprep.subr.mxu0 0.0
    %1697 = vmatpush1.msra.mxu0 %v1623
    %1698 = vmatprep.subr.mxu0 0.0
    %1699 = vmatpush2.msra.mxu0 0.0
    %1700 = vmatprep.subr.mxu0 0.0
    %1701 = vmatpush2.msra.mxu0 0.0
    %1702 = vmatprep.subr.mxu0 0.0
    %1703 = vmatpush2.msra.mxu0 0.0
    %1704 = vmatprep.subr.mxu0 0.0
    %1705 = vmatpush2.msra.mxu0 0.0
    %1706 = vmatprep.subr.mxu0 0.0
    %1707 = vmatpush2.msra.mxu0 0.0
    %1708 = vmatprep.subr.mxu0 0.0
    %1709 = vmatpush2.msra.mxu0 0.0
    %1710 = vmatprep.subr.mxu0 0.0
    %1711 = vmatpush2.msra.mxu0 0.0
    %1712 = vmatprep.subr.mxu0 0.0
    %1713 = vmatpush2.msra.mxu0 0.0
    %1714 = vmatprep.subr.mxu0 0.0
    %1715 = vmatpush2.msra.mxu0 0.0
    %1716 = vmatprep.subr.mxu0 0.0
    %1717 = vmatpush2.msra.mxu0 0.0
    %1718 = vmatprep.subr.mxu0 0.0
    %1719 = vmatpush2.msra.mxu0 0.0
    %1720 = vmatprep.subr.mxu0 0.0
    %1721 = vmatpush2.msra.mxu0 0.0
    %1722 = vmatprep.subr.mxu0 0.0
    %1723 = vmatpush2.msra.mxu0 0.0
    %1724 = vmatprep.subr.mxu0 0.0
    %1725 = vmatpush2.msra.mxu0 0.0
    %1726 = vmatprep.subr.mxu0 0.0
    %1727 = vmatpush2.msra.mxu0 0.0
    %1728 = vmatprep.subr.mxu0 0.0
    %1729 = vmatpush2.msra.mxu0 0.0
    %1730 = vmatprep.mubr.f32.mxu0 0.0
    %1731 = vmatmul.mubr.f32.gmra.mxu0 %v1643
    %v1732 = vpop.f32.mrf.mxu0
    %v1733 = vadd.f32 %v1640, %v1732
    %v1734 = vpop.f32.mrf.mxu0
    %1735 = vmatprep.mubr.f32.mxu0 0.0
    %1736 = vmatmul.mubr.f32.gmra.mxu0 %v1646
    %v1737 = vpop.f32.mrf.mxu0
    %v1738 = vadd.f32 %v1640, %v1737
    %v1739 = vpop.f32.mrf.mxu0
    %1740 = vmatprep.mubr.f32.mxu0 0.0
    %1741 = vmatmul.mubr.f32.gmra.mxu0 %v1649
    %v1742 = vpop.f32.mrf.mxu0
    %v1743 = vadd.f32 %v1640, %v1742
    %v1744 = vpop.f32.mrf.mxu0
    %1745 = vmatprep.mubr.f32.mxu0 0.0
    %1746 = vmatmul.mubr.f32.gmra.mxu0 %v1652
    %v1747 = vpop.f32.mrf.mxu0
    %v1748 = vadd.f32 %v1640, %v1747
    %v1749 = vpop.f32.mrf.mxu0
    %1750 = vmatprep.mubr.f32.mxu0 0.0
    %1751 = vmatmul.mubr.f32.gmra.mxu0 %v1655
    %v1752 = vpop.f32.mrf.mxu0
    %v1753 = vadd.f32 %v1640, %v1752
    %v1754 = vpop.f32.mrf.mxu0
    %1755 = vmatprep.mubr.f32.mxu0 0.0
    %1756 = vmatmul.mubr.f32.gmra.mxu0 %v1658
    %v1757 = vpop.f32.mrf.mxu0
    %v1758 = vadd.f32 %v1640, %v1757
    %v1759 = vpop.f32.mrf.mxu0
    %1760 = vmatprep.mubr.f32.mxu0 0.0
    %1761 = vmatmul.mubr.f32.gmra.mxu0 %v1661
    %v1762 = vpop.f32.mrf.mxu0
    %v1763 = vadd.f32 %v1640, %v1762
    %v1764 = vpop.f32.mrf.mxu0
    %1765 = vmatprep.mubr.f32.mxu0 0.0
    %1766 = vmatmul.mubr.f32.gmra.mxu0 %v1664
    %v1767 = vpop.f32.mrf.mxu0
    %v1768 = vadd.f32 %v1640, %v1767
    %v1769 = vpop.f32.mrf.mxu0
    %1770 = vdwg.mxu0
    %1771 = vst [vmem:[#allocation8] sm:$0xff] %v1733
    %1772 = vst [vmem:[#allocation8 + $0x8] sm:$0xff] %v1738
    %1773 = vst [vmem:[#allocation8 + $0x10] sm:$0xff] %v1743
    %1774 = vst [vmem:[#allocation8 + $0x18] sm:$0xff] %v1748
    %1775 = vst [vmem:[#allocation8 + $0x20] sm:$0xff] %v1753
    %1776 = vst [vmem:[#allocation8 + $0x28] sm:$0xff] %v1758
    %1777 = vst [vmem:[#allocation8 + $0x30] sm:$0xff] %v1763
    %1778 = vst [vmem:[#allocation8 + $0x38] sm:$0xff] %v1768
    // Predicated region
    $region46: #{tpu_custom_call.1} parent=1 // pred_check
      _
    $region47: #{tpu_custom_call.1} parent=1 // pred_check_branch
      %1780 = sbr.rel (0) target = $region49
    $region48: #{tpu_custom_call.1} parent=1 // pred_region
      %s1782 = ssub.s32 1024, 1024
      %1783 = vsyncadd [#allocation5], %s1782
      %s1784 = sshll.u32 [#allocation8], 4
      %s1785 = int_to_ptr.vmem [resolvable:$true] %s1784
      %1790 = dma.vmem_to_hbm [thread:$0]  %s1785, 1024, %s9, [#allocation5], 128, 128, 8
    $region49: #{tpu_custom_call.1} parent=1 // pred_fallthru
      _
    // Predicated region
    $region50: #{tpu_custom_call.1} parent=1 // pred_check
      _
    $region51: #{tpu_custom_call.1} parent=1 // pred_check_branch
      %1792 = sbr.rel (0) target = $region53
    $region52: #{tpu_custom_call.1} parent=1 // pred_region
      %s1794 = ssub.s32 256, 256
      %1795 = vsyncadd [#allocation10], %s1794
      %s1796 = sshll.u32 [#allocation9], 4
      %s1797 = int_to_ptr.vmem [resolvable:$true] %s1796
      %1802 = dma.vmem_to_hbm [thread:$0]  %s1797, 256, %s10, [#allocation10], 128, 128, 8
    $region53: #{tpu_custom_call.1} parent=1 // pred_fallthru
      _
    // Predicated region
    $region54: #{tpu_custom_call.1} parent=1 // pred_check
      _
    $region55: #{tpu_custom_call.1} parent=1 // pred_check_branch
      %1804 = sbr.rel (0) target = $region57
    $region56: #{tpu_custom_call.1} parent=1 // pred_region
      %1805 = dma.done [#allocation5], 1024
    $region57: #{tpu_custom_call.1} parent=1 // pred_fallthru
      _
    // Predicated region
    $region58: #{tpu_custom_call.1} parent=1 // pred_check
      _
    $region59: #{tpu_custom_call.1} parent=1 // pred_check_branch
      %1807 = sbr.rel (0) target = $region61
    $region60: #{tpu_custom_call.1} parent=1 // pred_region
      %1808 = dma.done [#allocation10], 256
    $region61: #{tpu_custom_call.1} parent=1 // pred_fallthru
      _
    %1809 = vsyncpa [#allocation4], 1
    %1810 = vsyncpa [#allocation7], 1
    %1811 = vsyncpa [#allocation5], 1
    %1812 = vsyncpa [#allocation10], 1

</llo_original>
